<compile_context>
chip_gen: v5e
topology: v5e:2x2
jax: 0.10.0
libtpu: 0.0.40
codegen_flags: <defaults>
</compile_context>

<pallas_src>
import functools

import jax
import jax.numpy as jnp
import numpy as np
from jax import lax
from jax.experimental import pallas as pl
from jax.experimental.pallas import tpu as pltpu

LP = 8  # left alignment pad (columns) inside the VMEM padded tile; sublane multiple


def _dwblock_kernel(x_ref, top_ref, bot_ref, wdw_ref, bdw_ref, wsep_ref,
                    bsep_ref, out_ref, xt_ref, *,
                    TH, RB, W, Wo_pad, stride, RC, mm_dtype):
    """One (batch, row-tile) grid step.

    x_ref   : (RB, W, Cin)        core input rows of this tile (batch dim squeezed)
    top_ref : (1, W, Cin)         input row just above the tile (zeros at image top)
    bot_ref : (1, W, Cin)         input row just below the tile (zeros at image bottom)
    wdw_ref : (3, 3, Cin)         depthwise weights, BN_dw scale folded in
    bdw_ref : (1, 1, Cin)         BN_dw folded bias
    wsep_ref: (Cin, Cout)         1x1 weights, BN_sep scale folded in (mm_dtype)
    bsep_ref: (1, 1, Cout)        BN_sep folded bias
    out_ref : (TH, Wo_pad, Cout)  lane-dense, sublane-aligned output block
    xt_ref  : (RB+2, Wxt, Cin)    VMEM scratch: padded input tile
    """
    Cin = x_ref.shape[-1]
    Wxt = xt_ref.shape[1]
    zdt = xt_ref.dtype

    # ---- assemble the padded input tile in VMEM ------------------------------
    # Data lives at columns [LP, LP+W): LP=8 keeps the (large) core-row store
    # sublane aligned.  Columns [0, LP-1) are never read and stay uninitialized;
    # only the two thin zero strips the conv taps actually read are written.
    # They are rewritten every step (cheap) instead of being guarded with
    # pl.when(program_id==0): scratch is per-core, so a "first step only" guard
    # would leave it uninitialized on the second core under megacore sharding.
    xt_ref[:, LP - 1:LP, :] = jnp.zeros((RB + 2, 1, Cin), zdt)       # left conv pad
    if LP + W < Wxt:
        xt_ref[:, LP + W:Wxt, :] = jnp.zeros((RB + 2, Wxt - LP - W, Cin), zdt)
    xt_ref[0:1, LP:LP + W, :] = top_ref[...]                         # top halo
    xt_ref[RB + 1:RB + 2, LP:LP + W, :] = bot_ref[...]               # bottom halo
    xt_ref[1:RB + 1, LP:LP + W, :] = x_ref[...]                      # core rows

    wdw = wdw_ref[...]                      # (3, 3, Cin), BN_dw scale folded in
    bdw = bdw_ref[...]                      # (1, 1, Cin)
    wsep = wsep_ref[...]                    # (Cin, Cout), mm_dtype
    bsep = bsep_ref[...]                    # (1, 1, Cout)

    Wslab = Wxt - (LP - 1)                  # slab width for stride=1 roll taps

    def process_chunk(r0):
        """Full fused block for RC output rows starting at (tile-local) row r0."""
        acc = None
        for kh in range(3):
            if stride == 1:
                # One slab load per kh; column shifts ride the XLU (roll) and
                # co-issue with the VPU multiply-adds.  Wrapped elements only
                # land beyond column Wo_pad and are sliced off.
                slab = xt_ref[pl.ds(r0 + kh, RC), pl.ds(LP - 1, Wslab), :]
                slab = slab.astype(jnp.float32)
                for kw in range(3):
                    shifted = slab if kw == 0 else pltpu.roll(
                        slab, shift=Wslab - kw, axis=1)
                    tap = shifted[:, :Wo_pad, :] * wdw[kh, kw]
                    acc = tap if acc is None else acc + tap
            else:
                # stride > 1: compute only the kept output positions.
                rows = pl.ds(r0 * stride + kh, RC, stride)
                for kw in range(3):
                    cols = pl.ds(LP - 1 + kw, Wo_pad, stride)
                    tap = xt_ref[rows, cols, :].astype(jnp.float32) * wdw[kh, kw]
                    acc = tap if acc is None else acc + tap

        # BN_dw bias + ReLU (scale already folded into wdw); acc stays f32.
        acc = jnp.maximum(acc + bdw, 0.0)

        # Pointwise 1x1 conv on the MXU; Wo_pad % 8 == 0 keeps the reshape free.
        flat = acc.reshape(RC * Wo_pad, Cin).astype(mm_dtype)
        y = jnp.dot(flat, wsep, preferred_element_type=jnp.float32)
        y = y.reshape(RC, Wo_pad, -1)

        # BN_sep bias + ReLU + cast fused into one dense store of this chunk.
        y = jnp.maximum(y + bsep, 0.0)
        out_ref[pl.ds(r0, RC), :, :] = y.astype(out_ref.dtype)

    n_chunks = TH // RC
    if n_chunks == 1:
        process_chunk(0)
    else:
        def body(c, carry):
            process_chunk(pl.multiple_of(c * RC, RC))
            return carry
        lax.fori_loop(0, n_chunks, body, 0, unroll=True)


def _pick_row_tile(Ho, H, stride, target):
    """Largest divisor of Ho <= target whose row tiles also partition H exactly."""
    for th in range(min(target, Ho), 0, -1):
        if Ho % th:
            continue
        nt = Ho // th
        if nt == 1 or th * stride * nt == H:
            return th
    return Ho


def _pick_row_chunk(TH, target):
    """Largest divisor of TH <= target (rows per register-resident chunk)."""
    for rc in range(min(target, TH), 0, -1):
        if TH % rc == 0:
            return rc
    return TH


def depthwise_block(x_nhwc, params, *, stride=1, eps=1e-5, row_tile=16,
                    row_chunk=8, matmul_dtype=jnp.bfloat16, out_dtype=None,
                    vmem_limit_bytes=None):
    """Fused DepthWiseBlock forward (eval-mode BN, ReLU).

    x_nhwc: (B, H, W, Cin) NHWC activations; returns (B, Ho, Wo, Cout) NHWC.
    Keep the whole network's activations in NHWC so no layout transpose is ever
    materialized in HBM around the kernel.
    """
    B, H, W, Cin = x_nhwc.shape
    out_dtype = x_nhwc.dtype if out_dtype is None else out_dtype

    Ho = (H + 2 - 3) // stride + 1
    Wo = (W + 2 - 3) // stride + 1
    Wo_pad = -(-Wo // 8) * 8                       # sublane-multiple output width
    TH = _pick_row_tile(Ho, H, stride, row_tile)   # output rows per grid step
    n_tiles = Ho // TH
    RB = H // n_tiles                              # core input rows per tile
    RC = _pick_row_chunk(TH, row_chunk)            # output rows per register chunk
    if stride == 1:
        Wxt = (LP - 1) + (Wo_pad + 8)              # slab width rounded to sublanes
    else:
        Wxt = LP + 2 + (Wo_pad - 1) * stride
    assert Ho % TH == 0 and H % n_tiles == 0
    assert n_tiles == 1 or RB == TH * stride

    # ---- fold BatchNorms (eval mode) into the conv weights / biases ----
    sdw = params["bn_dw_g"] / jnp.sqrt(params["bn_dw_v"] + eps)
    bdw = (params["bn_dw_b"] - params["bn_dw_m"] * sdw).reshape(1, 1, Cin)
    wdw = jnp.transpose(params["w_dw"][:, 0, :, :], (1, 2, 0)) * sdw     # (3,3,Cin)

    ssep = params["bn_sep_g"] / jnp.sqrt(params["bn_sep_v"] + eps)
    wsep = jnp.transpose(params["w_sep"][:, :, 0, 0], (1, 0)) * ssep[None, :]
    Cout = wsep.shape[1]
    wsep = wsep.astype(matmul_dtype)
    bsep = (params["bn_sep_b"] - params["bn_sep_m"] * ssep).reshape(1, 1, Cout)

    # ---- one-row top/bottom halos per row tile (tiny, auto-pipelined) ----
    zrow = jnp.zeros((B, 1, W, Cin), x_nhwc.dtype)
    if n_tiles > 1:
        top_halo = jnp.concatenate([zrow, x_nhwc[:, RB - 1:H - 1:RB]], axis=1)
        bot_halo = jnp.concatenate([x_nhwc[:, RB:H:RB], zrow], axis=1)
    else:
        top_halo = zrow
        bot_halo = zrow

    kernel = functools.partial(_dwblock_kernel, TH=TH, RB=RB, W=W,
                               Wo_pad=Wo_pad, stride=stride, RC=RC,
                               mm_dtype=matmul_dtype)

    cost = pl.CostEstimate(
        flops=2 * B * Ho * Wo * Cin * (Cout + 9),
        transcendentals=0,
        bytes_accessed=(B * H * W * Cin * np.dtype(x_nhwc.dtype).itemsize
                        + B * Ho * Wo_pad * Cout * np.dtype(out_dtype).itemsize
                        + Cin * Cout * np.dtype(matmul_dtype).itemsize))

    cp_kwargs = dict(dimension_semantics=("parallel", "parallel"))
    if vmem_limit_bytes is not None:
        cp_kwargs["vmem_limit_bytes"] = int(vmem_limit_bytes)

    out = pl.pallas_call(
        kernel,
        out_shape=jax.ShapeDtypeStruct((B, Ho, Wo_pad, Cout), out_dtype),
        grid_spec=pltpu.PrefetchScalarGridSpec(
            num_scalar_prefetch=0,
            grid=(B, n_tiles),
            in_specs=[
                pl.BlockSpec((None, RB, W, Cin), lambda b, t: (b, t, 0, 0)),
                pl.BlockSpec((None, 1, W, Cin), lambda b, t: (b, t, 0, 0)),
                pl.BlockSpec((None, 1, W, Cin), lambda b, t: (b, t, 0, 0)),
                pl.BlockSpec((3, 3, Cin), lambda b, t: (0, 0, 0)),
                pl.BlockSpec((1, 1, Cin), lambda b, t: (0, 0, 0)),
                pl.BlockSpec((Cin, Cout), lambda b, t: (0, 0)),
                pl.BlockSpec((1, 1, Cout), lambda b, t: (0, 0, 0)),
            ],
            out_specs=pl.BlockSpec((None, TH, Wo_pad, Cout),
                                   lambda b, t: (b, t, 0, 0)),
            scratch_shapes=[pltpu.VMEM((RB + 2, Wxt, Cin), x_nhwc.dtype)],
        ),
        compiler_params=pltpu.CompilerParams(**cp_kwargs),
        cost_estimate=cost,
    )(x_nhwc, top_halo, bot_halo, wdw, bdw, wsep, bsep)

    # Dense in-kernel store; the (cheap) width slice happens once out here.
    return out if Wo == Wo_pad else out[:, :, :Wo, :]


def _reference_nhwc(x, params, *, stride=1, eps=1e-5):
    """Pure-JAX (lax conv) reference in NHWC for correctness checks."""
    Cin = x.shape[-1]
    wdw = jnp.transpose(params["w_dw"], (2, 3, 1, 0))          # (3,3,1,Cin) HWIO
    y = jax.lax.conv_general_dilated(
        x, wdw, window_strides=(stride, stride), padding=((1, 1), (1, 1)),
        dimension_numbers=("NHWC", "HWIO", "NHWC"), feature_group_count=Cin)
    s = params["bn_dw_g"] / jnp.sqrt(params["bn_dw_v"] + eps)
    y = y * s + (params["bn_dw_b"] - params["bn_dw_m"] * s)
    y = jnp.maximum(y, 0.0)
    wsep = jnp.transpose(params["w_sep"], (2, 3, 1, 0))         # (1,1,Cin,Cout)
    y = jax.lax.conv_general_dilated(
        y, wsep, window_strides=(1, 1), padding="VALID",
        dimension_numbers=("NHWC", "HWIO", "NHWC"))
    s = params["bn_sep_g"] / jnp.sqrt(params["bn_sep_v"] + eps)
    y = y * s + (params["bn_sep_b"] - params["bn_sep_m"] * s)
    return jnp.maximum(y, 0.0)


def init_params(key, inplanes, planes):
    ks = jax.random.split(key, 10)
    return {
        "w_dw": jax.random.normal(ks[0], (inplanes, 1, 3, 3), jnp.float32) * 0.2,
        "bn_dw_g": 1.0 + 0.1 * jax.random.normal(ks[1], (inplanes,), jnp.float32),
        "bn_dw_b": 0.1 * jax.random.normal(ks[2], (inplanes,), jnp.float32),
        "bn_dw_m": 0.1 * jax.random.normal(ks[3], (inplanes,), jnp.float32),
        "bn_dw_v": jnp.abs(jax.random.normal(ks[4], (inplanes,), jnp.float32)) + 0.5,
        "w_sep": jax.random.normal(ks[5], (planes, inplanes, 1, 1), jnp.float32) * 0.2,
        "bn_sep_g": 1.0 + 0.1 * jax.random.normal(ks[6], (planes,), jnp.float32),
        "bn_sep_b": 0.1 * jax.random.normal(ks[7], (planes,), jnp.float32),
        "bn_sep_m": 0.1 * jax.random.normal(ks[8], (planes,), jnp.float32),
        "bn_sep_v": jnp.abs(jax.random.normal(ks[9], (planes,), jnp.float32)) + 0.5,
    }


if __name__ == "__main__":
    key = jax.random.PRNGKey(0)

    configs = [
        # primary config: stride 1, 2 row tiles, single chunk per tile
        dict(B=2, Cin=4, Cout=8, H=16, W=16, stride=1, row_tile=8, row_chunk=8,
             mm=jnp.float32, rtol=1e-4, atol=1e-4),
        # stride-2 path with strided taps + row tiling
        dict(B=2, Cin=8, Cout=16, H=16, W=16, stride=2, row_tile=4, row_chunk=8,
             mm=jnp.float32, rtol=1e-4, atol=1e-4),
        # non-multiple-of-8 output width (dense Wo_pad store + wrapper slice),
        # bf16 matmul operands
        dict(B=1, Cin=4, Cout=8, H=12, W=12, stride=1, row_tile=6, row_chunk=8,
             mm=jnp.bfloat16, rtol=2e-2, atol=2e-2),
        # exercises the register-chunked fori_loop path (2 chunks per row tile)
        dict(B=1, Cin=8, Cout=16, H=32, W=32, stride=1, row_tile=16, row_chunk=8,
             mm=jnp.float32, rtol=1e-4, atol=1e-4),
    ]

    for cfg in configs:
        key, kx, kp = jax.random.split(key, 3)
        x = jax.random.normal(
            kx, (cfg["B"], cfg["H"], cfg["W"], cfg["Cin"]), jnp.float32)
        params = init_params(kp, cfg["Cin"], cfg["Cout"])

        fwd = jax.jit(functools.partial(
            depthwise_block, stride=cfg["stride"], row_tile=cfg["row_tile"],
            row_chunk=cfg["row_chunk"], matmul_dtype=cfg["mm"]))
        out = jax.block_until_ready(fwd(x, params))

        ref = jax.block_until_ready(
            _reference_nhwc(x, params, stride=cfg["stride"]))

        Ho = (cfg["H"] - 1) // cfg["stride"] + 1
        Wo = (cfg["W"] - 1) // cfg["stride"] + 1
        assert out.shape == (cfg["B"], Ho, Wo, cfg["Cout"])
        np.testing.assert_allclose(np.asarray(out, dtype=np.float32),
                                   np.asarray(ref),
                                   rtol=cfg["rtol"], atol=cfg["atol"])

    print("KERNEL_OK")
</pallas_src>

<mosaic_0001>
module attributes {stable_mosaic.version = 11 : i64} {
  func.func @_dwblock_kernel(%arg0: i32, %arg1: i32, %arg2: memref<1x8x16x4xf32, #tpu.memory_space<vmem>>, %arg3: memref<1x1x16x4xf32, #tpu.memory_space<vmem>>, %arg4: memref<1x1x16x4xf32, #tpu.memory_space<vmem>>, %arg5: memref<3x3x4xf32, #tpu.memory_space<vmem>>, %arg6: memref<1x1x4xf32, #tpu.memory_space<vmem>>, %arg7: memref<4x8xf32, #tpu.memory_space<vmem>>, %arg8: memref<1x1x8xf32, #tpu.memory_space<vmem>>, %arg9: memref<1x8x16x8xf32, #tpu.memory_space<vmem>>, %arg10: memref<10x31x4xf32, #tpu.memory_space<vmem>>) attributes {dimension_semantics = [#tpu.dimension_semantics<parallel>, #tpu.dimension_semantics<parallel>], iteration_bounds = array<i64: 2, 2>, scalar_prefetch = 0 : i64, scratch_operands = 1 : i64, tpu.core_type = #tpu.core_type<tc>, window_params = [{transform_indices = @transform_0, window_bounds = array<i64: 1, 8, 16, 4>}, {transform_indices = @transform_1, window_bounds = array<i64: 1, 1, 16, 4>}, {transform_indices = @transform_2, window_bounds = array<i64: 1, 1, 16, 4>}, {pipeline_mode = #tpu.pipeline_mode<synchronous>, transform_indices = @transform_3, window_bounds = array<i64: 3, 3, 4>}, {pipeline_mode = #tpu.pipeline_mode<synchronous>, transform_indices = @transform_4, window_bounds = array<i64: 1, 1, 4>}, {pipeline_mode = #tpu.pipeline_mode<synchronous>, transform_indices = @transform_5, window_bounds = array<i64: 4, 8>}, {pipeline_mode = #tpu.pipeline_mode<synchronous>, transform_indices = @transform_6, window_bounds = array<i64: 1, 1, 8>}, {transform_indices = @transform_7, window_bounds = array<i64: 1, 8, 16, 8>}]} {
    %cst = arith.constant 0.000000e+00 : f32
    %0 = vector.broadcast %cst : f32 to vector<10x1x4xf32>
    %c0 = arith.constant 0 : index
    %c7 = arith.constant 7 : index
    %c0_0 = arith.constant 0 : index
    %1 = vector.load %arg10[%c0, %c7, %c0_0] : memref<10x31x4xf32, #tpu.memory_space<vmem>>, vector<10x1x4xf32>
    tpu.vector_store %arg10[%c0, %c7, %c0_0], %0 {strides = array<i32>} : memref<10x31x4xf32, #tpu.memory_space<vmem>>, vector<10x1x4xf32>,
    %cst_1 = arith.constant 0.000000e+00 : f32
    %2 = vector.broadcast %cst_1 : f32 to vector<10x7x4xf32>
    %c0_2 = arith.constant 0 : index
    %c24 = arith.constant 24 : index
    %c0_3 = arith.constant 0 : index
    %3 = vector.load %arg10[%c0_2, %c24, %c0_3] : memref<10x31x4xf32, #tpu.memory_space<vmem>>, vector<10x7x4xf32>
    tpu.vector_store %arg10[%c0_2, %c24, %c0_3], %2 {strides = array<i32>} : memref<10x31x4xf32, #tpu.memory_space<vmem>>, vector<10x7x4xf32>,
    %c0_4 = arith.constant 0 : index
    %c0_5 = arith.constant 0 : index
    %c0_6 = arith.constant 0 : index
    %c0_7 = arith.constant 0 : index
    %4 = vector.load %arg3[%c0_4, %c0_5, %c0_6, %c0_7] : memref<1x1x16x4xf32, #tpu.memory_space<vmem>>, vector<1x1x16x4xf32>
    %5 = vector.shape_cast %4 : vector<1x1x16x4xf32> to vector<1x16x4xf32>
    %c0_8 = arith.constant 0 : index
    %c8 = arith.constant 8 : index
    %c0_9 = arith.constant 0 : index
    %6 = vector.load %arg10[%c0_8, %c8, %c0_9] : memref<10x31x4xf32, #tpu.memory_space<vmem>>, vector<1x16x4xf32>
    tpu.vector_store %arg10[%c0_8, %c8, %c0_9], %5 {strides = array<i32>} : memref<10x31x4xf32, #tpu.memory_space<vmem>>, vector<1x16x4xf32>,
    %c0_10 = arith.constant 0 : index
    %c0_11 = arith.constant 0 : index
    %c0_12 = arith.constant 0 : index
    %c0_13 = arith.constant 0 : index
    %7 = vector.load %arg4[%c0_10, %c0_11, %c0_12, %c0_13] : memref<1x1x16x4xf32, #tpu.memory_space<vmem>>, vector<1x1x16x4xf32>
    %8 = vector.shape_cast %7 : vector<1x1x16x4xf32> to vector<1x16x4xf32>
    %c9 = arith.constant 9 : index
    %c8_14 = arith.constant 8 : index
    %c0_15 = arith.constant 0 : index
    %9 = vector.load %arg10[%c9, %c8_14, %c0_15] : memref<10x31x4xf32, #tpu.memory_space<vmem>>, vector<1x16x4xf32>
    tpu.vector_store %arg10[%c9, %c8_14, %c0_15], %8 {strides = array<i32>} : memref<10x31x4xf32, #tpu.memory_space<vmem>>, vector<1x16x4xf32>,
    %c0_16 = arith.constant 0 : index
    %c0_17 = arith.constant 0 : index
    %c0_18 = arith.constant 0 : index
    %c0_19 = arith.constant 0 : index
    %10 = vector.load %arg2[%c0_16, %c0_17, %c0_18, %c0_19] : memref<1x8x16x4xf32, #tpu.memory_space<vmem>>, vector<1x8x16x4xf32>
    %11 = vector.shape_cast %10 : vector<1x8x16x4xf32> to vector<8x16x4xf32>
    %c1 = arith.constant 1 : index
    %c8_20 = arith.constant 8 : index
    %c0_21 = arith.constant 0 : index
    %12 = vector.load %arg10[%c1, %c8_20, %c0_21] : memref<10x31x4xf32, #tpu.memory_space<vmem>>, vector<8x16x4xf32>
    tpu.vector_store %arg10[%c1, %c8_20, %c0_21], %11 {strides = array<i32>} : memref<10x31x4xf32, #tpu.memory_space<vmem>>, vector<8x16x4xf32>,
    %c0_22 = arith.constant 0 : index
    %c0_23 = arith.constant 0 : index
    %c0_24 = arith.constant 0 : index
    %13 = vector.load %arg5[%c0_22, %c0_23, %c0_24] : memref<3x3x4xf32, #tpu.memory_space<vmem>>, vector<3x3x4xf32>
    %c0_25 = arith.constant 0 : index
    %c0_26 = arith.constant 0 : index
    %c0_27 = arith.constant 0 : index
    %14 = vector.load %arg6[%c0_25, %c0_26, %c0_27] : memref<1x1x4xf32, #tpu.memory_space<vmem>>, vector<1x1x4xf32>
    %c0_28 = arith.constant 0 : index
    %c0_29 = arith.constant 0 : index
    %15 = vector.load %arg7[%c0_28, %c0_29] : memref<4x8xf32, #tpu.memory_space<vmem>>, vector<4x8xf32>
    %c0_30 = arith.constant 0 : index
    %c0_31 = arith.constant 0 : index
    %c0_32 = arith.constant 0 : index
    %16 = vector.load %arg8[%c0_30, %c0_31, %c0_32] : memref<1x1x8xf32, #tpu.memory_space<vmem>>, vector<1x1x8xf32>
    %c0_33 = arith.constant 0 : index
    %c7_34 = arith.constant 7 : index
    %c0_35 = arith.constant 0 : index
    %17 = vector.load %arg10[%c0_33, %c7_34, %c0_35] : memref<10x31x4xf32, #tpu.memory_space<vmem>>, vector<8x24x4xf32>
    %18 = vector.extract_strided_slice %17 {offsets = [0, 0, 0], sizes = [8, 16, 4], strides = [1, 1, 1]} : vector<8x24x4xf32> to vector<8x16x4xf32>
    %19 = vector.extract_strided_slice %13 {offsets = [0, 0, 0], sizes = [1, 1, 4], strides = [1, 1, 1]} : vector<3x3x4xf32> to vector<1x1x4xf32>
    %20 = vector.shape_cast %19 : vector<1x1x4xf32> to vector<4xf32>
    %21 = vector.shape_cast %20 : vector<4xf32> to vector<1x1x4xf32>
    %22 = vector.broadcast %21 : vector<1x1x4xf32> to vector<8x16x4xf32>
    %23 = arith.mulf %18, %22 : vector<8x16x4xf32>
    %c23_i32 = arith.constant 23 : i32
    %24 = tpu.dynamic_rotate %17 by %c23_i32 dim 1 : vector<8x24x4xf32>, i32 -> vector<8x24x4xf32>
    %25 = vector.extract_strided_slice %24 {offsets = [0, 0, 0], sizes = [8, 16, 4], strides = [1, 1, 1]} : vector<8x24x4xf32> to vector<8x16x4xf32>
    %26 = vector.extract_strided_slice %13 {offsets = [0, 1, 0], sizes = [1, 1, 4], strides = [1, 1, 1]} : vector<3x3x4xf32> to vector<1x1x4xf32>
    %27 = vector.shape_cast %26 : vector<1x1x4xf32> to vector<4xf32>
    %28 = vector.shape_cast %27 : vector<4xf32> to vector<1x1x4xf32>
    %29 = vector.broadcast %28 : vector<1x1x4xf32> to vector<8x16x4xf32>
    %30 = arith.mulf %25, %29 : vector<8x16x4xf32>
    %31 = arith.addf %23, %30 : vector<8x16x4xf32>
    %c22_i32 = arith.constant 22 : i32
    %32 = tpu.dynamic_rotate %17 by %c22_i32 dim 1 : vector<8x24x4xf32>, i32 -> vector<8x24x4xf32>
    %33 = vector.extract_strided_slice %32 {offsets = [0, 0, 0], sizes = [8, 16, 4], strides = [1, 1, 1]} : vector<8x24x4xf32> to vector<8x16x4xf32>
    %34 = vector.extract_strided_slice %13 {offsets = [0, 2, 0], sizes = [1, 1, 4], strides = [1, 1, 1]} : vector<3x3x4xf32> to vector<1x1x4xf32>
    %35 = vector.shape_cast %34 : vector<1x1x4xf32> to vector<4xf32>
    %36 = vector.shape_cast %35 : vector<4xf32> to vector<1x1x4xf32>
    %37 = vector.broadcast %36 : vector<1x1x4xf32> to vector<8x16x4xf32>
    %38 = arith.mulf %33, %37 : vector<8x16x4xf32>
    %39 = arith.addf %31, %38 : vector<8x16x4xf32>
    %c1_36 = arith.constant 1 : index
    %c7_37 = arith.constant 7 : index
    %c0_38 = arith.constant 0 : index
    %40 = vector.load %arg10[%c1_36, %c7_37, %c0_38] : memref<10x31x4xf32, #tpu.memory_space<vmem>>, vector<8x24x4xf32>
    %41 = vector.extract_strided_slice %40 {offsets = [0, 0, 0], sizes = [8, 16, 4], strides = [1, 1, 1]} : vector<8x24x4xf32> to vector<8x16x4xf32>
    %42 = vector.extract_strided_slice %13 {offsets = [1, 0, 0], sizes = [1, 1, 4], strides = [1, 1, 1]} : vector<3x3x4xf32> to vector<1x1x4xf32>
    %43 = vector.shape_cast %42 : vector<1x1x4xf32> to vector<4xf32>
    %44 = vector.shape_cast %43 : vector<4xf32> to vector<1x1x4xf32>
    %45 = vector.broadcast %44 : vector<1x1x4xf32> to vector<8x16x4xf32>
    %46 = arith.mulf %41, %45 : vector<8x16x4xf32>
    %47 = arith.addf %39, %46 : vector<8x16x4xf32>
    %c23_i32_39 = arith.constant 23 : i32
    %48 = tpu.dynamic_rotate %40 by %c23_i32_39 dim 1 : vector<8x24x4xf32>, i32 -> vector<8x24x4xf32>
    %49 = vector.extract_strided_slice %48 {offsets = [0, 0, 0], sizes = [8, 16, 4], strides = [1, 1, 1]} : vector<8x24x4xf32> to vector<8x16x4xf32>
    %50 = vector.extract_strided_slice %13 {offsets = [1, 1, 0], sizes = [1, 1, 4], strides = [1, 1, 1]} : vector<3x3x4xf32> to vector<1x1x4xf32>
    %51 = vector.shape_cast %50 : vector<1x1x4xf32> to vector<4xf32>
    %52 = vector.shape_cast %51 : vector<4xf32> to vector<1x1x4xf32>
    %53 = vector.broadcast %52 : vector<1x1x4xf32> to vector<8x16x4xf32>
    %54 = arith.mulf %49, %53 : vector<8x16x4xf32>
    %55 = arith.addf %47, %54 : vector<8x16x4xf32>
    %c22_i32_40 = arith.constant 22 : i32
    %56 = tpu.dynamic_rotate %40 by %c22_i32_40 dim 1 : vector<8x24x4xf32>, i32 -> vector<8x24x4xf32>
    %57 = vector.extract_strided_slice %56 {offsets = [0, 0, 0], sizes = [8, 16, 4], strides = [1, 1, 1]} : vector<8x24x4xf32> to vector<8x16x4xf32>
    %58 = vector.extract_strided_slice %13 {offsets = [1, 2, 0], sizes = [1, 1, 4], strides = [1, 1, 1]} : vector<3x3x4xf32> to vector<1x1x4xf32>
    %59 = vector.shape_cast %58 : vector<1x1x4xf32> to vector<4xf32>
    %60 = vector.shape_cast %59 : vector<4xf32> to vector<1x1x4xf32>
    %61 = vector.broadcast %60 : vector<1x1x4xf32> to vector<8x16x4xf32>
    %62 = arith.mulf %57, %61 : vector<8x16x4xf32>
    %63 = arith.addf %55, %62 : vector<8x16x4xf32>
    %c2 = arith.constant 2 : index
    %c7_41 = arith.constant 7 : index
    %c0_42 = arith.constant 0 : index
    %64 = vector.load %arg10[%c2, %c7_41, %c0_42] : memref<10x31x4xf32, #tpu.memory_space<vmem>>, vector<8x24x4xf32>
    %65 = vector.extract_strided_slice %64 {offsets = [0, 0, 0], sizes = [8, 16, 4], strides = [1, 1, 1]} : vector<8x24x4xf32> to vector<8x16x4xf32>
    %66 = vector.extract_strided_slice %13 {offsets = [2, 0, 0], sizes = [1, 1, 4], strides = [1, 1, 1]} : vector<3x3x4xf32> to vector<1x1x4xf32>
    %67 = vector.shape_cast %66 : vector<1x1x4xf32> to vector<4xf32>
    %68 = vector.shape_cast %67 : vector<4xf32> to vector<1x1x4xf32>
    %69 = vector.broadcast %68 : vector<1x1x4xf32> to vector<8x16x4xf32>
    %70 = arith.mulf %65, %69 : vector<8x16x4xf32>
    %71 = arith.addf %63, %70 : vector<8x16x4xf32>
    %c23_i32_43 = arith.constant 23 : i32
    %72 = tpu.dynamic_rotate %64 by %c23_i32_43 dim 1 : vector<8x24x4xf32>, i32 -> vector<8x24x4xf32>
    %73 = vector.extract_strided_slice %72 {offsets = [0, 0, 0], sizes = [8, 16, 4], strides = [1, 1, 1]} : vector<8x24x4xf32> to vector<8x16x4xf32>
    %74 = vector.extract_strided_slice %13 {offsets = [2, 1, 0], sizes = [1, 1, 4], strides = [1, 1, 1]} : vector<3x3x4xf32> to vector<1x1x4xf32>
    %75 = vector.shape_cast %74 : vector<1x1x4xf32> to vector<4xf32>
    %76 = vector.shape_cast %75 : vector<4xf32> to vector<1x1x4xf32>
    %77 = vector.broadcast %76 : vector<1x1x4xf32> to vector<8x16x4xf32>
    %78 = arith.mulf %73, %77 : vector<8x16x4xf32>
    %79 = arith.addf %71, %78 : vector<8x16x4xf32>
    %c22_i32_44 = arith.constant 22 : i32
    %80 = tpu.dynamic_rotate %64 by %c22_i32_44 dim 1 : vector<8x24x4xf32>, i32 -> vector<8x24x4xf32>
    %81 = vector.extract_strided_slice %80 {offsets = [0, 0, 0], sizes = [8, 16, 4], strides = [1, 1, 1]} : vector<8x24x4xf32> to vector<8x16x4xf32>
    %82 = vector.extract_strided_slice %13 {offsets = [2, 2, 0], sizes = [1, 1, 4], strides = [1, 1, 1]} : vector<3x3x4xf32> to vector<1x1x4xf32>
    %83 = vector.shape_cast %82 : vector<1x1x4xf32> to vector<4xf32>
    %84 = vector.shape_cast %83 : vector<4xf32> to vector<1x1x4xf32>
    %85 = vector.broadcast %84 : vector<1x1x4xf32> to vector<8x16x4xf32>
    %86 = arith.mulf %81, %85 : vector<8x16x4xf32>
    %87 = arith.addf %79, %86 : vector<8x16x4xf32>
    %88 = vector.broadcast %14 : vector<1x1x4xf32> to vector<8x16x4xf32>
    %89 = arith.addf %87, %88 : vector<8x16x4xf32>
    %cst_45 = arith.constant 0.000000e+00 : f32
    %90 = vector.broadcast %cst_45 : f32 to vector<8x16x4xf32>
    %91 = arith.maximumf %89, %90 : vector<8x16x4xf32>
    %92 = vector.shape_cast %91 : vector<8x16x4xf32> to vector<128x4xf32>
    %cst_46 = arith.constant dense<0.000000e+00> : vector<128x8xf32>
    %93 = tpu.matmul %92, %15, %cst_46 {dimension_numbers = #tpu.dot_dimension_numbers<[1], [0], [0], [1], [0, 0, 1, 1], [], []>} : vector<128x4xf32>, vector<4x8xf32>, vector<128x8xf32> -> vector<128x8xf32>
    %94 = vector.shape_cast %93 : vector<128x8xf32> to vector<8x16x8xf32>
    %95 = vector.broadcast %16 : vector<1x1x8xf32> to vector<8x16x8xf32>
    %96 = arith.addf %94, %95 : vector<8x16x8xf32>
    %cst_47 = arith.constant 0.000000e+00 : f32
    %97 = vector.broadcast %cst_47 : f32 to vector<8x16x8xf32>
    %98 = arith.maximumf %96, %97 : vector<8x16x8xf32>
    %c0_48 = arith.constant 0 : index
    %c0_49 = arith.constant 0 : index
    %c0_50 = arith.constant 0 : index
    %c0_51 = arith.constant 0 : index
    %99 = vector.load %arg9[%c0_48, %c0_49, %c0_50, %c0_51] : memref<1x8x16x8xf32, #tpu.memory_space<vmem>>, vector<1x8x16x8xf32>
    %100 = vector.shape_cast %99 : vector<1x8x16x8xf32> to vector<8x16x8xf32>
    %101 = vector.shape_cast %98 : vector<8x16x8xf32> to vector<1x8x16x8xf32>
    tpu.vector_store %arg9[%c0_48, %c0_49, %c0_50, %c0_51], %101 {strides = array<i32>} : memref<1x8x16x8xf32, #tpu.memory_space<vmem>>, vector<1x8x16x8xf32>,
    return
  }
  func.func @transform_0(%arg0: i32, %arg1: i32) -> (i32, i32, i32, i32) {
    %c0_i32 = arith.constant 0 : i32
    %c0_i32_0 = arith.constant 0 : i32
    %c0_i32_1 = arith.constant 0 : i32
    return %arg0, %arg1, %c0_i32, %c0_i32_0 : i32, i32, i32, i32
  }
  func.func @transform_1(%arg0: i32, %arg1: i32) -> (i32, i32, i32, i32) {
    %c0_i32 = arith.constant 0 : i32
    %c0_i32_0 = arith.constant 0 : i32
    %c0_i32_1 = arith.constant 0 : i32
    return %arg0, %arg1, %c0_i32, %c0_i32_0 : i32, i32, i32, i32
  }
  func.func @transform_2(%arg0: i32, %arg1: i32) -> (i32, i32, i32, i32) {
    %c0_i32 = arith.constant 0 : i32
    %c0_i32_0 = arith.constant 0 : i32
    %c0_i32_1 = arith.constant 0 : i32
    return %arg0, %arg1, %c0_i32, %c0_i32_0 : i32, i32, i32, i32
  }
  func.func @transform_3(%arg0: i32, %arg1: i32) -> (i32, i32, i32) {
    %c0_i32 = arith.constant 0 : i32
    %c0_i32_0 = arith.constant 0 : i32
    %c0_i32_1 = arith.constant 0 : i32
    %c0_i32_2 = arith.constant 0 : i32
    return %c0_i32, %c0_i32_0, %c0_i32_1 : i32, i32, i32
  }
  func.func @transform_4(%arg0: i32, %arg1: i32) -> (i32, i32, i32) {
    %c0_i32 = arith.constant 0 : i32
    %c0_i32_0 = arith.constant 0 : i32
    %c0_i32_1 = arith.constant 0 : i32
    %c0_i32_2 = arith.constant 0 : i32
    return %c0_i32, %c0_i32_0, %c0_i32_1 : i32, i32, i32
  }
  func.func @transform_5(%arg0: i32, %arg1: i32) -> (i32, i32) {
    %c0_i32 = arith.constant 0 : i32
    %c0_i32_0 = arith.constant 0 : i32
    %c0_i32_1 = arith.constant 0 : i32
    return %c0_i32, %c0_i32_0 : i32, i32
  }
  func.func @transform_6(%arg0: i32, %arg1: i32) -> (i32, i32, i32) {
    %c0_i32 = arith.constant 0 : i32
    %c0_i32_0 = arith.constant 0 : i32
    %c0_i32_1 = arith.constant 0 : i32
    %c0_i32_2 = arith.constant 0 : i32
    return %c0_i32, %c0_i32_0, %c0_i32_1 : i32, i32, i32
  }
  func.func @transform_7(%arg0: i32, %arg1: i32) -> (i32, i32, i32, i32) {
    %c0_i32 = arith.constant 0 : i32
    %c0_i32_0 = arith.constant 0 : i32
    %c0_i32_1 = arith.constant 0 : i32
    return %arg0, %arg1, %c0_i32, %c0_i32_0 : i32, i32, i32, i32
  }
}

</mosaic_0001>

<llo_original>
// kernel: depthwise_block.1
$region0: #{depthwise_block.1}
  #allocation0 [shape = 'u32[]', space=smem, size = 0x4, offset = 0x4, fixed_abs, tag = 'smem constant byte address 0x4 - core index']
  #allocation1 [shape = 'u32[72,128]{1,0:T(1,128)}', space=vmem, size = 0x9000, scoped, tag = 'internal scratch']
  #allocation2 [shape = 'f32[10,31,4]{2,1,0:T(8,128)}', space=vmem, size = 0x28000, scoped, tag = 'scratch operand']
  %s0 = inlined_call_operand.vmem [shape: f32[2,16,16,4], index: 0, kind: input, shape index: {}]
  %s1 = inlined_call_operand.vmem [shape: f32[2,2,16,4], index: 1, kind: input, shape index: {}]
  %s2 = inlined_call_operand.vmem [shape: f32[2,2,16,4], index: 2, kind: input, shape index: {}]
  %s3 = inlined_call_operand.vmem [shape: f32[3,3,4], index: 3, kind: input, shape index: {}]
  %s4 = inlined_call_operand.vmem [shape: f32[1,1,4], index: 4, kind: input, shape index: {}]
  %s5 = inlined_call_operand.vmem [shape: f32[4,8], index: 5, kind: input, shape index: {}]
  %s6 = inlined_call_operand.vmem [shape: f32[1,1,8], index: 6, kind: input, shape index: {}]
  %s7 = inlined_call_operand.vmem [shape: f32[2,16,16,8], index: 7, kind: output, shape index: {}]
  %s8 = sld [smem:[#allocation0]]
  $region61: #{depthwise_block.1} parent=0
    _
  %s10 = ssub.s32 1, %s8
  %s11 = scalar_select 0, %s10, %s8
  loop: start=0, step=1, limit=6
  $region2: #{depthwise_block.1} parent=0 // loop_pre_header
    _
  $region3: #{depthwise_block.1} parent=0 // loop_header
    %s13 = sphi 0, %s17
    %p14 = scmp.ge.s32.totalorder %s13, 6
    %s20 = sphi 0, %s32
    %s21 = sphi 0, %s28
    %s22 = sphi 0, %s20
    %s23 = sphi 0, %s21
    %s24 = sphi 0, %s22
    %s25 = sphi 0, %s23
    %s37 = sphi 0, %s39
    %s40 = sphi 0, %s37
    %s41 = sphi 0, %s40
    %s57 = sphi 0, %s41
    %s65 = sphi 0, %s67
    %s68 = sphi 0, %s65
    %s69 = sphi 0, %s68
    %s85 = sphi 0, %s69
    %s93 = sphi 0, %s95
    %s96 = sphi 0, %s93
    %s97 = sphi 0, %s96
    %s113 = sphi 0, %s97
    %s117 = sphi 0, %s117
    %s119 = sphi 0, %s117
    %s120 = sphi 0, %s119
    %s134 = sphi 0, %s120
    %s138 = sphi 0, %s138
    %s140 = sphi 0, %s138
    %s141 = sphi 0, %s140
    %s155 = sphi 0, %s141
    %s159 = sphi 0, %s159
    %s161 = sphi 0, %s159
    %s162 = sphi 0, %s161
    %s176 = sphi 0, %s162
    %s180 = sphi 0, %s180
    %s182 = sphi 0, %s180
    %s183 = sphi 0, %s182
    %s197 = sphi 0, %s183
    %s205 = sphi 0, %s207
    %s208 = sphi 0, %s205
    %s209 = sphi 0, %s208
    %s225 = sphi 0, %s209
  $region4: #{depthwise_block.1} parent=0 // loop_header_branch
    %16 = sbr.rel (%p14) target = $region8
  $region5: #{depthwise_block.1} parent=0 // loop_body
    %s18 = ssub.s32 %s13, 1
    %s19 = ssub.s32 %s13, 2
    %s26 = sadd.s32 1, %s21
    %p27 = scmp.ge.s32.totalorder %s26, 2
    %s28 = scalar_select %p27, 0, %s26
    %s29 = sadd.s32 1, %s20
    %s30 = scalar_select %p27, %s29, %s20
    %p31 = scmp.ge.s32.totalorder %s30, 2
    %s32 = scalar_select %p31, 0, %s30
    %s33 = ssub.s32 %s20, %s32
    %s34 = ssub.s32 %s21, %s28
    %s35 = sor.u32 %s33, %s34
    %p36 = scmp.eq.s32.totalorder %s35, 0
    %s38 = sadd.s32 %s37, 1
    %s39 = scalar_select %p36, %s37, %s38
    %p42 = pneg %p36
    %p43 = scmp.eq.s32.totalorder %s13, 3
    %p44 = por %p42, %p43
    %p45 = scmp.ne.s32.totalorder %s37, %s40
    %p46 = scmp.eq.s32.totalorder %s13, 0
    %p47 = por %p45, %p46
    %p48 = scmp.ne.s32.totalorder %s37, %s40
    %p49 = scmp.eq.s32.totalorder %s18, 3
    %p50 = por %p48, %p49
    %p51 = scmp.ne.s32.totalorder %s40, %s41
    %p52 = scmp.eq.s32.totalorder %s18, 0
    %p53 = por %p51, %p52
    %p54 = scmp.ne.s32.totalorder %s40, %s41
    %p55 = scmp.eq.s32.totalorder %s19, 3
    %p56 = por %p54, %p55
    %p58 = scmp.ne.s32.totalorder %s41, %s57
    %p59 = scmp.eq.s32.totalorder %s19, 0
    %p60 = por %p58, %p59
    %s61 = ssub.s32 %s20, %s32
    %s62 = ssub.s32 %s21, %s28
    %s63 = sor.u32 %s61, %s62
    %p64 = scmp.eq.s32.totalorder %s63, 0
    %s66 = sadd.s32 %s65, 1
    %s67 = scalar_select %p64, %s65, %s66
    %p70 = pneg %p64
    %p71 = scmp.eq.s32.totalorder %s13, 3
    %p72 = por %p70, %p71
    %p73 = scmp.ne.s32.totalorder %s65, %s68
    %p74 = scmp.eq.s32.totalorder %s13, 0
    %p75 = por %p73, %p74
    %p76 = scmp.ne.s32.totalorder %s65, %s68
    %p77 = scmp.eq.s32.totalorder %s18, 3
    %p78 = por %p76, %p77
    %p79 = scmp.ne.s32.totalorder %s68, %s69
    %p80 = scmp.eq.s32.totalorder %s18, 0
    %p81 = por %p79, %p80
    %p82 = scmp.ne.s32.totalorder %s68, %s69
    %p83 = scmp.eq.s32.totalorder %s19, 3
    %p84 = por %p82, %p83
    %p86 = scmp.ne.s32.totalorder %s69, %s85
    %p87 = scmp.eq.s32.totalorder %s19, 0
    %p88 = por %p86, %p87
    %s89 = ssub.s32 %s20, %s32
    %s90 = ssub.s32 %s21, %s28
    %s91 = sor.u32 %s89, %s90
    %p92 = scmp.eq.s32.totalorder %s91, 0
    %s94 = sadd.s32 %s93, 1
    %s95 = scalar_select %p92, %s93, %s94
    %p98 = pneg %p92
    %p99 = scmp.eq.s32.totalorder %s13, 3
    %p100 = por %p98, %p99
    %p101 = scmp.ne.s32.totalorder %s93, %s96
    %p102 = scmp.eq.s32.totalorder %s13, 0
    %p103 = por %p101, %p102
    %p104 = scmp.ne.s32.totalorder %s93, %s96
    %p105 = scmp.eq.s32.totalorder %s18, 3
    %p106 = por %p104, %p105
    %p107 = scmp.ne.s32.totalorder %s96, %s97
    %p108 = scmp.eq.s32.totalorder %s18, 0
    %p109 = por %p107, %p108
    %p110 = scmp.ne.s32.totalorder %s96, %s97
    %p111 = scmp.eq.s32.totalorder %s19, 3
    %p112 = por %p110, %p111
    %p114 = scmp.ne.s32.totalorder %s97, %s113
    %p115 = scmp.eq.s32.totalorder %s19, 0
    %p116 = por %p114, %p115
    %s118 = sadd.s32 %s117, 1
    %p121 = scmp.eq.s32.totalorder %s13, 3
    %p122 = scmp.ne.s32.totalorder %s117, %s119
    %p123 = scmp.eq.s32.totalorder %s13, 0
    %p124 = por %p122, %p123
    %p125 = scmp.ne.s32.totalorder %s117, %s119
    %p126 = scmp.eq.s32.totalorder %s18, 3
    %p127 = por %p125, %p126
    %p128 = scmp.ne.s32.totalorder %s119, %s120
    %p129 = scmp.eq.s32.totalorder %s18, 0
    %p130 = por %p128, %p129
    %p131 = scmp.ne.s32.totalorder %s119, %s120
    %p132 = scmp.eq.s32.totalorder %s19, 3
    %p133 = por %p131, %p132
    %p135 = scmp.ne.s32.totalorder %s120, %s134
    %p136 = scmp.eq.s32.totalorder %s19, 0
    %p137 = por %p135, %p136
    %s139 = sadd.s32 %s138, 1
    %p142 = scmp.eq.s32.totalorder %s13, 3
    %p143 = scmp.ne.s32.totalorder %s138, %s140
    %p144 = scmp.eq.s32.totalorder %s13, 0
    %p145 = por %p143, %p144
    %p146 = scmp.ne.s32.totalorder %s138, %s140
    %p147 = scmp.eq.s32.totalorder %s18, 3
    %p148 = por %p146, %p147
    %p149 = scmp.ne.s32.totalorder %s140, %s141
    %p150 = scmp.eq.s32.totalorder %s18, 0
    %p151 = por %p149, %p150
    %p152 = scmp.ne.s32.totalorder %s140, %s141
    %p153 = scmp.eq.s32.totalorder %s19, 3
    %p154 = por %p152, %p153
    %p156 = scmp.ne.s32.totalorder %s141, %s155
    %p157 = scmp.eq.s32.totalorder %s19, 0
    %p158 = por %p156, %p157
    %s160 = sadd.s32 %s159, 1
    %p163 = scmp.eq.s32.totalorder %s13, 3
    %p164 = scmp.ne.s32.totalorder %s159, %s161
    %p165 = scmp.eq.s32.totalorder %s13, 0
    %p166 = por %p164, %p165
    %p167 = scmp.ne.s32.totalorder %s159, %s161
    %p168 = scmp.eq.s32.totalorder %s18, 3
    %p169 = por %p167, %p168
    %p170 = scmp.ne.s32.totalorder %s161, %s162
    %p171 = scmp.eq.s32.totalorder %s18, 0
    %p172 = por %p170, %p171
    %p173 = scmp.ne.s32.totalorder %s161, %s162
    %p174 = scmp.eq.s32.totalorder %s19, 3
    %p175 = por %p173, %p174
    %p177 = scmp.ne.s32.totalorder %s162, %s176
    %p178 = scmp.eq.s32.totalorder %s19, 0
    %p179 = por %p177, %p178
    %s181 = sadd.s32 %s180, 1
    %p184 = scmp.eq.s32.totalorder %s13, 3
    %p185 = scmp.ne.s32.totalorder %s180, %s182
    %p186 = scmp.eq.s32.totalorder %s13, 0
    %p187 = por %p185, %p186
    %p188 = scmp.ne.s32.totalorder %s180, %s182
    %p189 = scmp.eq.s32.totalorder %s18, 3
    %p190 = por %p188, %p189
    %p191 = scmp.ne.s32.totalorder %s182, %s183
    %p192 = scmp.eq.s32.totalorder %s18, 0
    %p193 = por %p191, %p192
    %p194 = scmp.ne.s32.totalorder %s182, %s183
    %p195 = scmp.eq.s32.totalorder %s19, 3
    %p196 = por %p194, %p195
    %p198 = scmp.ne.s32.totalorder %s183, %s197
    %p199 = scmp.eq.s32.totalorder %s19, 0
    %p200 = por %p198, %p199
    %s201 = ssub.s32 %s20, %s32
    %s202 = ssub.s32 %s21, %s28
    %s203 = sor.u32 %s201, %s202
    %p204 = scmp.eq.s32.totalorder %s203, 0
    %s206 = sadd.s32 %s205, 1
    %s207 = scalar_select %p204, %s205, %s206
    %p210 = pneg %p204
    %p211 = scmp.eq.s32.totalorder %s13, 3
    %p212 = por %p210, %p211
    %p213 = scmp.ne.s32.totalorder %s205, %s208
    %p214 = scmp.eq.s32.totalorder %s13, 0
    %p215 = por %p213, %p214
    %p216 = scmp.ne.s32.totalorder %s205, %s208
    %p217 = scmp.eq.s32.totalorder %s18, 3
    %p218 = por %p216, %p217
    %p219 = scmp.ne.s32.totalorder %s208, %s209
    %p220 = scmp.eq.s32.totalorder %s18, 0
    %p221 = por %p219, %p220
    %p222 = scmp.ne.s32.totalorder %s208, %s209
    %p223 = scmp.eq.s32.totalorder %s19, 3
    %p224 = por %p222, %p223
    %p226 = scmp.ne.s32.totalorder %s209, %s225
    %p227 = scmp.eq.s32.totalorder %s19, 0
    %p228 = por %p226, %p227
    %p229 = scmp.le.s32.totalorder 1, %s13
    %p230 = scmp.lt.s32.totalorder %s13, 5
    %p231 = pnand %p229, %p230
    %p232 = pneg %p231
    // Predicated region
    $region9: #{depthwise_block.1} parent=5 // pred_check
      _
    $region10: #{depthwise_block.1} parent=5 // pred_check_branch
      %234 = sbr.rel (%p231) target = $region12
    $region11: #{depthwise_block.1} parent=5 // pred_region
      %s235 = ssub.s32 %s13, 1
      // Predicated region
      $region13: #{depthwise_block.1} parent=11 // pred_check
        %p236 = pneg %p130
      $region14: #{depthwise_block.1} parent=11 // pred_check_branch
        %238 = sbr.rel (%p236) target = $region16
      $region15: #{depthwise_block.1} parent=11 // pred_region
        _
      $region16: #{depthwise_block.1} parent=11 // pred_fallthru
        _
      // Predicated region
      $region17: #{depthwise_block.1} parent=11 // pred_check
        %p239 = pneg %p151
      $region18: #{depthwise_block.1} parent=11 // pred_check_branch
        %241 = sbr.rel (%p239) target = $region20
      $region19: #{depthwise_block.1} parent=11 // pred_region
        _
      $region20: #{depthwise_block.1} parent=11 // pred_fallthru
        _
      // Predicated region
      $region21: #{depthwise_block.1} parent=11 // pred_check
        %p242 = pneg %p172
      $region22: #{depthwise_block.1} parent=11 // pred_check_branch
        %244 = sbr.rel (%p242) target = $region24
      $region23: #{depthwise_block.1} parent=11 // pred_region
        _
      $region24: #{depthwise_block.1} parent=11 // pred_fallthru
        _
      // Predicated region
      $region25: #{depthwise_block.1} parent=11 // pred_check
        %p245 = pneg %p193
      $region26: #{depthwise_block.1} parent=11 // pred_check_branch
        %247 = sbr.rel (%p245) target = $region28
      $region27: #{depthwise_block.1} parent=11 // pred_region
        _
      $region28: #{depthwise_block.1} parent=11 // pred_fallthru
        _
    $region12: #{depthwise_block.1} parent=5 // pred_fallthru
      _
    %p248 = scmp.lt.s32.totalorder %s13, 4
    // Predicated region
    $region29: #{depthwise_block.1} parent=5 // pred_check
      %p249 = pneg %p248
    $region30: #{depthwise_block.1} parent=5 // pred_check_branch
      %251 = sbr.rel (%p249) target = $region32
    $region31: #{depthwise_block.1} parent=5 // pred_region
      // Predicated region
      $region33: #{depthwise_block.1} parent=31 // pred_check
        %p252 = pneg %p47
      $region34: #{depthwise_block.1} parent=31 // pred_check_branch
        %254 = sbr.rel (%p252) target = $region36
      $region35: #{depthwise_block.1} parent=31 // pred_region
        %s255 = smul.u32 8, %s21
        %p256 = scmp.lt.s32.totalorder %s20, 1
        %s257 = scalar_select %p256, %s20, 1
        %p258 = scmp.lt.s32.totalorder %s255, 15
        %s259 = scalar_select %p258, %s255, 15
        %s260 = smul.addr %s259, 2
        %s261 = smul.addr %s257, 32
        %s262 = sadd.s32 %s260, %s261
        %s263 = smul.addr %s262, 8
        %s264 = scalar_lea.vmem %s0, %s263
        %s265 = smul.u32 8, %s21
      $region36: #{depthwise_block.1} parent=31 // pred_fallthru
        _
      // Predicated region
      $region37: #{depthwise_block.1} parent=31 // pred_check
        %p266 = pneg %p75
      $region38: #{depthwise_block.1} parent=31 // pred_check_branch
        %268 = sbr.rel (%p266) target = $region40
      $region39: #{depthwise_block.1} parent=31 // pred_region
        %p269 = scmp.lt.s32.totalorder %s20, 1
        %s270 = scalar_select %p269, %s20, 1
        %p271 = scmp.lt.s32.totalorder %s21, 1
        %s272 = scalar_select %p271, %s21, 1
        %s273 = smul.addr %s272, 2
        %s274 = smul.addr %s270, 4
        %s275 = sadd.s32 %s273, %s274
        %s276 = smul.addr %s275, 8
        %s277 = scalar_lea.vmem %s1, %s276
      $region40: #{depthwise_block.1} parent=31 // pred_fallthru
        _
      // Predicated region
      $region41: #{depthwise_block.1} parent=31 // pred_check
        %p278 = pneg %p103
      $region42: #{depthwise_block.1} parent=31 // pred_check_branch
        %280 = sbr.rel (%p278) target = $region44
      $region43: #{depthwise_block.1} parent=31 // pred_region
        %p281 = scmp.lt.s32.totalorder %s20, 1
        %s282 = scalar_select %p281, %s20, 1
        %p283 = scmp.lt.s32.totalorder %s21, 1
        %s284 = scalar_select %p283, %s21, 1
        %s285 = smul.addr %s284, 2
        %s286 = smul.addr %s282, 4
        %s287 = sadd.s32 %s285, %s286
        %s288 = smul.addr %s287, 8
        %s289 = scalar_lea.vmem %s2, %s288
      $region44: #{depthwise_block.1} parent=31 // pred_fallthru
        _
    $region32: #{depthwise_block.1} parent=5 // pred_fallthru
      _
    %p290 = scmp.le.s32.totalorder 1, %s13
    %p291 = scmp.lt.s32.totalorder %s13, 5
    %p292 = pnand %p290, %p291
    %p293 = pneg %p292
    // Predicated region
    $region45: #{depthwise_block.1} parent=5 // pred_check
      _
    $region46: #{depthwise_block.1} parent=5 // pred_check_branch
      %295 = sbr.rel (%p292) target = $region48
    $region47: #{depthwise_block.1} parent=5 // pred_region
      %s296 = ssub.s32 %s13, 1
      %s297 = smul.u32 8, %s23
      %p298 = scmp.lt.s32.totalorder %s22, 1
      %s299 = scalar_select %p298, %s22, 1
      %p300 = scmp.lt.s32.totalorder %s297, 15
      %s301 = scalar_select %p300, %s297, 15
      %s302 = smul.addr %s301, 2
      %s303 = smul.addr %s299, 32
      %s304 = sadd.s32 %s302, %s303
      %s305 = smul.addr %s304, 8
      %s306 = scalar_lea.vmem %s0, %s305
      %p307 = pneg %p53
      %p308 = pneg %p50
      %p309 = scmp.lt.s32.totalorder %s22, 1
      %s310 = scalar_select %p309, %s22, 1
      %p311 = scmp.lt.s32.totalorder %s23, 1
      %s312 = scalar_select %p311, %s23, 1
      %s313 = smul.addr %s312, 2
      %s314 = smul.addr %s310, 4
      %s315 = sadd.s32 %s313, %s314
      %s316 = smul.addr %s315, 8
      %s317 = scalar_lea.vmem %s1, %s316
      %p318 = pneg %p81
      %p319 = pneg %p78
      %p320 = scmp.lt.s32.totalorder %s22, 1
      %s321 = scalar_select %p320, %s22, 1
      %p322 = scmp.lt.s32.totalorder %s23, 1
      %s323 = scalar_select %p322, %s23, 1
      %s324 = smul.addr %s323, 2
      %s325 = smul.addr %s321, 4
      %s326 = sadd.s32 %s324, %s325
      %s327 = smul.addr %s326, 8
      %s328 = scalar_lea.vmem %s2, %s327
      %p329 = pneg %p109
      %p330 = pneg %p106
      %p331 = pneg %p130
      %p332 = pneg %p127
      %p333 = pneg %p151
      %p334 = pneg %p148
      %p335 = pneg %p172
      %p336 = pneg %p169
      %p337 = pneg %p193
      %p338 = pneg %p190
      %p339 = pneg %p221
      %p340 = pneg %p218
      %s341 = smul.u32 8, %s23
      %p342 = scmp.lt.s32.totalorder %s22, 1
      %s343 = scalar_select %p342, %s22, 1
      %p344 = scmp.lt.s32.totalorder %s341, 15
      %s345 = scalar_select %p344, %s341, 15
      %s346 = smul.addr %s345, 2
      %s347 = smul.addr %s343, 32
      %s348 = sadd.s32 %s346, %s347
      %s349 = smul.addr %s348, 8
      %s350 = scalar_lea.vmem %s7, %s349
      %s351 = smul.u32 8, %s23
      %p352 = scmp.lt.s32.totalorder %s22, 1
      %s353 = scalar_select %p352, %s22, 1
      %p354 = scmp.lt.s32.totalorder %s351, 15
      %s355 = scalar_select %p354, %s351, 15
      %s356 = smul.addr %s355, 2
      %s357 = smul.addr %s353, 32
      %s358 = sadd.s32 %s356, %s357
      %s359 = smul.addr %s358, 8
      %s360 = scalar_lea.vmem %s0, %s359
      %s361 = smul.u32 8, %s23
      %p362 = scmp.lt.s32.totalorder %s22, 1
      %s363 = scalar_select %p362, %s22, 1
      %p364 = scmp.lt.s32.totalorder %s23, 1
      %s365 = scalar_select %p364, %s23, 1
      %s366 = smul.addr %s365, 2
      %s367 = smul.addr %s363, 4
      %s368 = sadd.s32 %s366, %s367
      %s369 = smul.addr %s368, 8
      %s370 = scalar_lea.vmem %s1, %s369
      %p371 = scmp.lt.s32.totalorder %s22, 1
      %s372 = scalar_select %p371, %s22, 1
      %p373 = scmp.lt.s32.totalorder %s23, 1
      %s374 = scalar_select %p373, %s23, 1
      %s375 = smul.addr %s374, 2
      %s376 = smul.addr %s372, 4
      %s377 = sadd.s32 %s375, %s376
      %s378 = smul.addr %s377, 8
      %s379 = scalar_lea.vmem %s2, %s378
      %s380 = smul.u32 8, %s23
      %p381 = scmp.lt.s32.totalorder %s22, 1
      %s382 = scalar_select %p381, %s22, 1
      %p383 = scmp.lt.s32.totalorder %s380, 15
      %s384 = scalar_select %p383, %s380, 15
      %s385 = smul.addr %s384, 2
      %s386 = smul.addr %s382, 32
      %s387 = sadd.s32 %s385, %s386
      %s388 = smul.addr %s387, 8
      %s389 = scalar_lea.vmem %s7, %s388
      %s390 = smul.u32 8, %s23
      %vm391 = vcmask 24576
      %392 = vst.msk [vmem:[#allocation2 + $0x7] sm:$0x1] %vm391, 0.0
      %393 = vst.msk [vmem:[#allocation2 + $0x27] sm:$0x1] %vm391, 0.0
      %394 = vst.msk [vmem:[#allocation2 + $0x47] sm:$0x1] %vm391, 0.0
      %395 = vst.msk [vmem:[#allocation2 + $0x67] sm:$0x1] %vm391, 0.0
      %396 = vst.msk [vmem:[#allocation2 + $0x87] sm:$0x1] %vm391, 0.0
      %397 = vst.msk [vmem:[#allocation2 + $0xa7] sm:$0x1] %vm391, 0.0
      %398 = vst.msk [vmem:[#allocation2 + $0xc7] sm:$0x1] %vm391, 0.0
      %399 = vst.msk [vmem:[#allocation2 + $0xe7] sm:$0x1] %vm391, 0.0
      %400 = vst.msk [vmem:[#allocation2 + $0x107] sm:$0x1] %vm391, 0.0
      %401 = vst.msk [vmem:[#allocation2 + $0x127] sm:$0x1] %vm391, 0.0
      %vm402 = vcmask 30720
      %403 = vst.msk [vmem:[#allocation2 + $0x18] sm:$0x7f] %vm402, 0.0
      %404 = vst.msk [vmem:[#allocation2 + $0x38] sm:$0x7f] %vm402, 0.0
      %405 = vst.msk [vmem:[#allocation2 + $0x58] sm:$0x7f] %vm402, 0.0
      %406 = vst.msk [vmem:[#allocation2 + $0x78] sm:$0x7f] %vm402, 0.0
      %407 = vst.msk [vmem:[#allocation2 + $0x98] sm:$0x7f] %vm402, 0.0
      %408 = vst.msk [vmem:[#allocation2 + $0xb8] sm:$0x7f] %vm402, 0.0
      %409 = vst.msk [vmem:[#allocation2 + $0xd8] sm:$0x7f] %vm402, 0.0
      %410 = vst.msk [vmem:[#allocation2 + $0xf8] sm:$0x7f] %vm402, 0.0
      %411 = vst.msk [vmem:[#allocation2 + $0x118] sm:$0x7f] %vm402, 0.0
      %412 = vst.msk [vmem:[#allocation2 + $0x138] sm:$0x7f] %vm402, 0.0
      %v413 = vld [vmem:[%s370] sm:$0xff]
      %v414 = vld [vmem:[%s370 + $0x8] sm:$0xff]
      %vm415 = vcmask 31744
      %416 = vst.msk [vmem:[#allocation2 + $0x8] sm:$0xff] %vm415, %v413
      %417 = vst.msk [vmem:[#allocation2 + $0x10] sm:$0xff] %vm415, %v414
      %v418 = vld [vmem:[%s379] sm:$0xff]
      %v419 = vld [vmem:[%s379 + $0x8] sm:$0xff]
      %s420 = scalar_lea.vmem [#allocation2], 288
      %421 = vst.msk [vmem:[%s420 + $0x8] sm:$0xff] %vm415, %v418
      %422 = vst.msk [vmem:[%s420 + $0x10] sm:$0xff] %vm415, %v419
      %v423 = vld [vmem:[%s360] sm:$0xff]
      %v424 = vld [vmem:[%s360 + $0x8] sm:$0xff]
      %v425 = vld [vmem:[%s360 + $0x10] sm:$0xff]
      %v426 = vld [vmem:[%s360 + $0x18] sm:$0xff]
      %v427 = vld [vmem:[%s360 + $0x20] sm:$0xff]
      %v428 = vld [vmem:[%s360 + $0x28] sm:$0xff]
      %v429 = vld [vmem:[%s360 + $0x30] sm:$0xff]
      %v430 = vld [vmem:[%s360 + $0x38] sm:$0xff]
      %v431 = vld [vmem:[%s360 + $0x40] sm:$0xff]
      %v432 = vld [vmem:[%s360 + $0x48] sm:$0xff]
      %v433 = vld [vmem:[%s360 + $0x50] sm:$0xff]
      %v434 = vld [vmem:[%s360 + $0x58] sm:$0xff]
      %v435 = vld [vmem:[%s360 + $0x60] sm:$0xff]
      %v436 = vld [vmem:[%s360 + $0x68] sm:$0xff]
      %v437 = vld [vmem:[%s360 + $0x70] sm:$0xff]
      %v438 = vld [vmem:[%s360 + $0x78] sm:$0xff]
      %s439 = scalar_lea.vmem [#allocation2], 32
      %440 = vst.msk [vmem:[%s439 + $0x8] sm:$0xff] %vm415, %v423
      %441 = vst.msk [vmem:[%s439 + $0x10] sm:$0xff] %vm415, %v424
      %442 = vst.msk [vmem:[%s439 + $0x28] sm:$0xff] %vm415, %v425
      %443 = vst.msk [vmem:[%s439 + $0x30] sm:$0xff] %vm415, %v426
      %444 = vst.msk [vmem:[%s439 + $0x48] sm:$0xff] %vm415, %v427
      %445 = vst.msk [vmem:[%s439 + $0x50] sm:$0xff] %vm415, %v428
      %446 = vst.msk [vmem:[%s439 + $0x68] sm:$0xff] %vm415, %v429
      %447 = vst.msk [vmem:[%s439 + $0x70] sm:$0xff] %vm415, %v430
      %448 = vst.msk [vmem:[%s439 + $0x88] sm:$0xff] %vm415, %v431
      %449 = vst.msk [vmem:[%s439 + $0x90] sm:$0xff] %vm415, %v432
      %450 = vst.msk [vmem:[%s439 + $0xa8] sm:$0xff] %vm415, %v433
      %451 = vst.msk [vmem:[%s439 + $0xb0] sm:$0xff] %vm415, %v434
      %452 = vst.msk [vmem:[%s439 + $0xc8] sm:$0xff] %vm415, %v435
      %453 = vst.msk [vmem:[%s439 + $0xd0] sm:$0xff] %vm415, %v436
      %454 = vst.msk [vmem:[%s439 + $0xe8] sm:$0xff] %vm415, %v437
      %455 = vst.msk [vmem:[%s439 + $0xf0] sm:$0xff] %vm415, %v438
      %v456 = vld [vmem:[%s3] sm:$0x7]
      %v457 = vld [vmem:[%s3 + $0x4] sm:$0x7]
      %v458 = vld [vmem:[%s3 + $0x8] sm:$0x7]
      %v459 = vld [vmem:[%s4] sm:$0x1]
      %v460 = vld [vmem:[%s5] sm:$0xf]
      %v461 = vld [vmem:[%s6] sm:$0x1]
      %v462 = vld [vmem:[#allocation2 + $0x7] sm:$0xff]
      %v463 = vld [vmem:[#allocation2 + $0xf] sm:$0xff]
      %v464 = vld [vmem:[#allocation2 + $0x17] sm:$0xff]
      %v465 = vld [vmem:[#allocation2 + $0x27] sm:$0xff]
      %v466 = vld [vmem:[#allocation2 + $0x2f] sm:$0xff]
      %v467 = vld [vmem:[#allocation2 + $0x37] sm:$0xff]
      %v468 = vld [vmem:[#allocation2 + $0x47] sm:$0xff]
      %v469 = vld [vmem:[#allocation2 + $0x4f] sm:$0xff]
      %v470 = vld [vmem:[#allocation2 + $0x57] sm:$0xff]
      %v471 = vld [vmem:[#allocation2 + $0x67] sm:$0xff]
      %v472 = vld [vmem:[#allocation2 + $0x6f] sm:$0xff]
      %v473 = vld [vmem:[#allocation2 + $0x77] sm:$0xff]
      %v474 = vld [vmem:[#allocation2 + $0x87] sm:$0xff]
      %v475 = vld [vmem:[#allocation2 + $0x8f] sm:$0xff]
      %v476 = vld [vmem:[#allocation2 + $0x97] sm:$0xff]
      %v477 = vld [vmem:[#allocation2 + $0xa7] sm:$0xff]
      %v478 = vld [vmem:[#allocation2 + $0xaf] sm:$0xff]
      %v479 = vld [vmem:[#allocation2 + $0xb7] sm:$0xff]
      %v480 = vld [vmem:[#allocation2 + $0xc7] sm:$0xff]
      %v481 = vld [vmem:[#allocation2 + $0xcf] sm:$0xff]
      %v482 = vld [vmem:[#allocation2 + $0xd7] sm:$0xff]
      %v483 = vld [vmem:[#allocation2 + $0xe7] sm:$0xff]
      %v484 = vld [vmem:[#allocation2 + $0xef] sm:$0xff]
      %v485 = vld [vmem:[#allocation2 + $0xf7] sm:$0xff]
      %v486 = vperm.slane %v456, 0
      %v487 = vmul.f32 %v462, %v486
      %v488 = vmul.f32 %v463, %v486
      %v489 = vmul.f32 %v465, %v486
      %v490 = vmul.f32 %v466, %v486
      %v491 = vmul.f32 %v468, %v486
      %v492 = vmul.f32 %v469, %v486
      %v493 = vmul.f32 %v471, %v486
      %v494 = vmul.f32 %v472, %v486
      %v495 = vmul.f32 %v474, %v486
      %v496 = vmul.f32 %v475, %v486
      %v497 = vmul.f32 %v477, %v486
      %v498 = vmul.f32 %v478, %v486
      %v499 = vmul.f32 %v480, %v486
      %v500 = vmul.f32 %v481, %v486
      %v501 = vmul.f32 %v483, %v486
      %v502 = vmul.f32 %v484, %v486
      %v503 = vrot.slane %v462, 1
      %v504 = vrot.slane %v465, 1
      %v505 = vrot.slane %v468, 1
      %v506 = vrot.slane %v471, 1
      %v507 = vrot.slane %v474, 1
      %v508 = vrot.slane %v477, 1
      %v509 = vrot.slane %v480, 1
      %v510 = vrot.slane %v483, 1
      %v511 = vrot.slane %v463, 1
      %v512 = vrot.slane %v466, 1
      %v513 = vrot.slane %v469, 1
      %v514 = vrot.slane %v472, 1
      %v515 = vrot.slane %v475, 1
      %v516 = vrot.slane %v478, 1
      %v517 = vrot.slane %v481, 1
      %v518 = vrot.slane %v484, 1
      %v519 = vrot.slane %v464, 1
      %v520 = vrot.slane %v467, 1
      %v521 = vrot.slane %v470, 1
      %v522 = vrot.slane %v473, 1
      %v523 = vrot.slane %v476, 1
      %v524 = vrot.slane %v479, 1
      %v525 = vrot.slane %v482, 1
      %v526 = vrot.slane %v485, 1
      %v527 = vlaneseq
      %v528 = vshrl.u32 %v527, 7
      %vm529 = vcmp.lt.s32.totalorder %v528, 7
      %v530 = vsel %vm529, %v511, %v519
      %v531 = vsel %vm529, %v512, %v520
      %v532 = vsel %vm529, %v513, %v521
      %v533 = vsel %vm529, %v514, %v522
      %v534 = vsel %vm529, %v515, %v523
      %v535 = vsel %vm529, %v516, %v524
      %v536 = vsel %vm529, %v517, %v525
      %v537 = vsel %vm529, %v518, %v526
      %v538 = vsel %vm529, %v503, %v511
      %v539 = vsel %vm529, %v504, %v512
      %v540 = vsel %vm529, %v505, %v513
      %v541 = vsel %vm529, %v506, %v514
      %v542 = vsel %vm529, %v507, %v515
      %v543 = vsel %vm529, %v508, %v516
      %v544 = vsel %vm529, %v509, %v517
      %v545 = vsel %vm529, %v510, %v518
      %v546 = vperm.slane %v456, 1
      %v547 = vmul.f32 %v538, %v546
      %v548 = vmul.f32 %v530, %v546
      %v549 = vmul.f32 %v539, %v546
      %v550 = vmul.f32 %v531, %v546
      %v551 = vmul.f32 %v540, %v546
      %v552 = vmul.f32 %v532, %v546
      %v553 = vmul.f32 %v541, %v546
      %v554 = vmul.f32 %v533, %v546
      %v555 = vmul.f32 %v542, %v546
      %v556 = vmul.f32 %v534, %v546
      %v557 = vmul.f32 %v543, %v546
      %v558 = vmul.f32 %v535, %v546
      %v559 = vmul.f32 %v544, %v546
      %v560 = vmul.f32 %v536, %v546
      %v561 = vmul.f32 %v545, %v546
      %v562 = vmul.f32 %v537, %v546
      %v563 = vadd.f32 %v487, %v547
      %v564 = vadd.f32 %v488, %v548
      %v565 = vadd.f32 %v489, %v549
      %v566 = vadd.f32 %v490, %v550
      %v567 = vadd.f32 %v491, %v551
      %v568 = vadd.f32 %v492, %v552
      %v569 = vadd.f32 %v493, %v553
      %v570 = vadd.f32 %v494, %v554
      %v571 = vadd.f32 %v495, %v555
      %v572 = vadd.f32 %v496, %v556
      %v573 = vadd.f32 %v497, %v557
      %v574 = vadd.f32 %v498, %v558
      %v575 = vadd.f32 %v499, %v559
      %v576 = vadd.f32 %v500, %v560
      %v577 = vadd.f32 %v501, %v561
      %v578 = vadd.f32 %v502, %v562
      %v579 = vrot.slane %v462, 2
      %v580 = vrot.slane %v465, 2
      %v581 = vrot.slane %v468, 2
      %v582 = vrot.slane %v471, 2
      %v583 = vrot.slane %v474, 2
      %v584 = vrot.slane %v477, 2
      %v585 = vrot.slane %v480, 2
      %v586 = vrot.slane %v483, 2
      %v587 = vrot.slane %v463, 2
      %v588 = vrot.slane %v466, 2
      %v589 = vrot.slane %v469, 2
      %v590 = vrot.slane %v472, 2
      %v591 = vrot.slane %v475, 2
      %v592 = vrot.slane %v478, 2
      %v593 = vrot.slane %v481, 2
      %v594 = vrot.slane %v484, 2
      %v595 = vrot.slane %v464, 2
      %v596 = vrot.slane %v467, 2
      %v597 = vrot.slane %v470, 2
      %v598 = vrot.slane %v473, 2
      %v599 = vrot.slane %v476, 2
      %v600 = vrot.slane %v479, 2
      %v601 = vrot.slane %v482, 2
      %v602 = vrot.slane %v485, 2
      %vm603 = vcmp.lt.s32.totalorder %v528, 6
      %v604 = vsel %vm603, %v587, %v595
      %v605 = vsel %vm603, %v588, %v596
      %v606 = vsel %vm603, %v589, %v597
      %v607 = vsel %vm603, %v590, %v598
      %v608 = vsel %vm603, %v591, %v599
      %v609 = vsel %vm603, %v592, %v600
      %v610 = vsel %vm603, %v593, %v601
      %v611 = vsel %vm603, %v594, %v602
      %v612 = vsel %vm603, %v579, %v587
      %v613 = vsel %vm603, %v580, %v588
      %v614 = vsel %vm603, %v581, %v589
      %v615 = vsel %vm603, %v582, %v590
      %v616 = vsel %vm603, %v583, %v591
      %v617 = vsel %vm603, %v584, %v592
      %v618 = vsel %vm603, %v585, %v593
      %v619 = vsel %vm603, %v586, %v594
      %v620 = vperm.slane %v456, 2
      %v621 = vmul.f32 %v612, %v620
      %v622 = vmul.f32 %v604, %v620
      %v623 = vmul.f32 %v613, %v620
      %v624 = vmul.f32 %v605, %v620
      %v625 = vmul.f32 %v614, %v620
      %v626 = vmul.f32 %v606, %v620
      %v627 = vmul.f32 %v615, %v620
      %v628 = vmul.f32 %v607, %v620
      %v629 = vmul.f32 %v616, %v620
      %v630 = vmul.f32 %v608, %v620
      %v631 = vmul.f32 %v617, %v620
      %v632 = vmul.f32 %v609, %v620
      %v633 = vmul.f32 %v618, %v620
      %v634 = vmul.f32 %v610, %v620
      %v635 = vmul.f32 %v619, %v620
      %v636 = vmul.f32 %v611, %v620
      %v637 = vadd.f32 %v563, %v621
      %v638 = vadd.f32 %v564, %v622
      %v639 = vadd.f32 %v565, %v623
      %v640 = vadd.f32 %v566, %v624
      %v641 = vadd.f32 %v567, %v625
      %v642 = vadd.f32 %v568, %v626
      %v643 = vadd.f32 %v569, %v627
      %v644 = vadd.f32 %v570, %v628
      %v645 = vadd.f32 %v571, %v629
      %v646 = vadd.f32 %v572, %v630
      %v647 = vadd.f32 %v573, %v631
      %v648 = vadd.f32 %v574, %v632
      %v649 = vadd.f32 %v575, %v633
      %v650 = vadd.f32 %v576, %v634
      %v651 = vadd.f32 %v577, %v635
      %v652 = vadd.f32 %v578, %v636
      %v653 = vld [vmem:[%s439 + $0x7] sm:$0xff]
      %v654 = vld [vmem:[%s439 + $0xf] sm:$0xff]
      %v655 = vld [vmem:[%s439 + $0x17] sm:$0xff]
      %v656 = vld [vmem:[%s439 + $0x27] sm:$0xff]
      %v657 = vld [vmem:[%s439 + $0x2f] sm:$0xff]
      %v658 = vld [vmem:[%s439 + $0x37] sm:$0xff]
      %v659 = vld [vmem:[%s439 + $0x47] sm:$0xff]
      %v660 = vld [vmem:[%s439 + $0x4f] sm:$0xff]
      %v661 = vld [vmem:[%s439 + $0x57] sm:$0xff]
      %v662 = vld [vmem:[%s439 + $0x67] sm:$0xff]
      %v663 = vld [vmem:[%s439 + $0x6f] sm:$0xff]
      %v664 = vld [vmem:[%s439 + $0x77] sm:$0xff]
      %v665 = vld [vmem:[%s439 + $0x87] sm:$0xff]
      %v666 = vld [vmem:[%s439 + $0x8f] sm:$0xff]
      %v667 = vld [vmem:[%s439 + $0x97] sm:$0xff]
      %v668 = vld [vmem:[%s439 + $0xa7] sm:$0xff]
      %v669 = vld [vmem:[%s439 + $0xaf] sm:$0xff]
      %v670 = vld [vmem:[%s439 + $0xb7] sm:$0xff]
      %v671 = vld [vmem:[%s439 + $0xc7] sm:$0xff]
      %v672 = vld [vmem:[%s439 + $0xcf] sm:$0xff]
      %v673 = vld [vmem:[%s439 + $0xd7] sm:$0xff]
      %v674 = vld [vmem:[%s439 + $0xe7] sm:$0xff]
      %v675 = vld [vmem:[%s439 + $0xef] sm:$0xff]
      %v676 = vld [vmem:[%s439 + $0xf7] sm:$0xff]
      %v677 = vperm.slane %v457, 0
      %v678 = vmul.f32 %v653, %v677
      %v679 = vmul.f32 %v654, %v677
      %v680 = vmul.f32 %v656, %v677
      %v681 = vmul.f32 %v657, %v677
      %v682 = vmul.f32 %v659, %v677
      %v683 = vmul.f32 %v660, %v677
      %v684 = vmul.f32 %v662, %v677
      %v685 = vmul.f32 %v663, %v677
      %v686 = vmul.f32 %v665, %v677
      %v687 = vmul.f32 %v666, %v677
      %v688 = vmul.f32 %v668, %v677
      %v689 = vmul.f32 %v669, %v677
      %v690 = vmul.f32 %v671, %v677
      %v691 = vmul.f32 %v672, %v677
      %v692 = vmul.f32 %v674, %v677
      %v693 = vmul.f32 %v675, %v677
      %v694 = vadd.f32 %v637, %v678
      %v695 = vadd.f32 %v638, %v679
      %v696 = vadd.f32 %v639, %v680
      %v697 = vadd.f32 %v640, %v681
      %v698 = vadd.f32 %v641, %v682
      %v699 = vadd.f32 %v642, %v683
      %v700 = vadd.f32 %v643, %v684
      %v701 = vadd.f32 %v644, %v685
      %v702 = vadd.f32 %v645, %v686
      %v703 = vadd.f32 %v646, %v687
      %v704 = vadd.f32 %v647, %v688
      %v705 = vadd.f32 %v648, %v689
      %v706 = vadd.f32 %v649, %v690
      %v707 = vadd.f32 %v650, %v691
      %v708 = vadd.f32 %v651, %v692
      %v709 = vadd.f32 %v652, %v693
      %v710 = vrot.slane %v653, 1
      %v711 = vrot.slane %v656, 1
      %v712 = vrot.slane %v659, 1
      %v713 = vrot.slane %v662, 1
      %v714 = vrot.slane %v665, 1
      %v715 = vrot.slane %v668, 1
      %v716 = vrot.slane %v671, 1
      %v717 = vrot.slane %v674, 1
      %v718 = vrot.slane %v654, 1
      %v719 = vrot.slane %v657, 1
      %v720 = vrot.slane %v660, 1
      %v721 = vrot.slane %v663, 1
      %v722 = vrot.slane %v666, 1
      %v723 = vrot.slane %v669, 1
      %v724 = vrot.slane %v672, 1
      %v725 = vrot.slane %v675, 1
      %v726 = vrot.slane %v655, 1
      %v727 = vrot.slane %v658, 1
      %v728 = vrot.slane %v661, 1
      %v729 = vrot.slane %v664, 1
      %v730 = vrot.slane %v667, 1
      %v731 = vrot.slane %v670, 1
      %v732 = vrot.slane %v673, 1
      %v733 = vrot.slane %v676, 1
      %v734 = vsel %vm529, %v718, %v726
      %v735 = vsel %vm529, %v719, %v727
      %v736 = vsel %vm529, %v720, %v728
      %v737 = vsel %vm529, %v721, %v729
      %v738 = vsel %vm529, %v722, %v730
      %v739 = vsel %vm529, %v723, %v731
      %v740 = vsel %vm529, %v724, %v732
      %v741 = vsel %vm529, %v725, %v733
      %v742 = vsel %vm529, %v710, %v718
      %v743 = vsel %vm529, %v711, %v719
      %v744 = vsel %vm529, %v712, %v720
      %v745 = vsel %vm529, %v713, %v721
      %v746 = vsel %vm529, %v714, %v722
      %v747 = vsel %vm529, %v715, %v723
      %v748 = vsel %vm529, %v716, %v724
      %v749 = vsel %vm529, %v717, %v725
      %v750 = vperm.slane %v457, 1
      %v751 = vmul.f32 %v742, %v750
      %v752 = vmul.f32 %v734, %v750
      %v753 = vmul.f32 %v743, %v750
      %v754 = vmul.f32 %v735, %v750
      %v755 = vmul.f32 %v744, %v750
      %v756 = vmul.f32 %v736, %v750
      %v757 = vmul.f32 %v745, %v750
      %v758 = vmul.f32 %v737, %v750
      %v759 = vmul.f32 %v746, %v750
      %v760 = vmul.f32 %v738, %v750
      %v761 = vmul.f32 %v747, %v750
      %v762 = vmul.f32 %v739, %v750
      %v763 = vmul.f32 %v748, %v750
      %v764 = vmul.f32 %v740, %v750
      %v765 = vmul.f32 %v749, %v750
      %v766 = vmul.f32 %v741, %v750
      %v767 = vadd.f32 %v694, %v751
      %v768 = vadd.f32 %v695, %v752
      %v769 = vadd.f32 %v696, %v753
      %v770 = vadd.f32 %v697, %v754
      %v771 = vadd.f32 %v698, %v755
      %v772 = vadd.f32 %v699, %v756
      %v773 = vadd.f32 %v700, %v757
      %v774 = vadd.f32 %v701, %v758
      %v775 = vadd.f32 %v702, %v759
      %v776 = vadd.f32 %v703, %v760
      %v777 = vadd.f32 %v704, %v761
      %v778 = vadd.f32 %v705, %v762
      %v779 = vadd.f32 %v706, %v763
      %v780 = vadd.f32 %v707, %v764
      %v781 = vadd.f32 %v708, %v765
      %v782 = vadd.f32 %v709, %v766
      %v783 = vrot.slane %v653, 2
      %v784 = vrot.slane %v656, 2
      %v785 = vrot.slane %v659, 2
      %v786 = vrot.slane %v662, 2
      %v787 = vrot.slane %v665, 2
      %v788 = vrot.slane %v668, 2
      %v789 = vrot.slane %v671, 2
      %v790 = vrot.slane %v674, 2
      %v791 = vrot.slane %v654, 2
      %v792 = vrot.slane %v657, 2
      %v793 = vrot.slane %v660, 2
      %v794 = vrot.slane %v663, 2
      %v795 = vrot.slane %v666, 2
      %v796 = vrot.slane %v669, 2
      %v797 = vrot.slane %v672, 2
      %v798 = vrot.slane %v675, 2
      %v799 = vrot.slane %v655, 2
      %v800 = vrot.slane %v658, 2
      %v801 = vrot.slane %v661, 2
      %v802 = vrot.slane %v664, 2
      %v803 = vrot.slane %v667, 2
      %v804 = vrot.slane %v670, 2
      %v805 = vrot.slane %v673, 2
      %v806 = vrot.slane %v676, 2
      %v807 = vsel %vm603, %v791, %v799
      %v808 = vsel %vm603, %v792, %v800
      %v809 = vsel %vm603, %v793, %v801
      %v810 = vsel %vm603, %v794, %v802
      %v811 = vsel %vm603, %v795, %v803
      %v812 = vsel %vm603, %v796, %v804
      %v813 = vsel %vm603, %v797, %v805
      %v814 = vsel %vm603, %v798, %v806
      %v815 = vsel %vm603, %v783, %v791
      %v816 = vsel %vm603, %v784, %v792
      %v817 = vsel %vm603, %v785, %v793
      %v818 = vsel %vm603, %v786, %v794
      %v819 = vsel %vm603, %v787, %v795
      %v820 = vsel %vm603, %v788, %v796
      %v821 = vsel %vm603, %v789, %v797
      %v822 = vsel %vm603, %v790, %v798
      %v823 = vperm.slane %v457, 2
      %v824 = vmul.f32 %v815, %v823
      %v825 = vmul.f32 %v807, %v823
      %v826 = vmul.f32 %v816, %v823
      %v827 = vmul.f32 %v808, %v823
      %v828 = vmul.f32 %v817, %v823
      %v829 = vmul.f32 %v809, %v823
      %v830 = vmul.f32 %v818, %v823
      %v831 = vmul.f32 %v810, %v823
      %v832 = vmul.f32 %v819, %v823
      %v833 = vmul.f32 %v811, %v823
      %v834 = vmul.f32 %v820, %v823
      %v835 = vmul.f32 %v812, %v823
      %v836 = vmul.f32 %v821, %v823
      %v837 = vmul.f32 %v813, %v823
      %v838 = vmul.f32 %v822, %v823
      %v839 = vmul.f32 %v814, %v823
      %v840 = vadd.f32 %v767, %v824
      %v841 = vadd.f32 %v768, %v825
      %v842 = vadd.f32 %v769, %v826
      %v843 = vadd.f32 %v770, %v827
      %v844 = vadd.f32 %v771, %v828
      %v845 = vadd.f32 %v772, %v829
      %v846 = vadd.f32 %v773, %v830
      %v847 = vadd.f32 %v774, %v831
      %v848 = vadd.f32 %v775, %v832
      %v849 = vadd.f32 %v776, %v833
      %v850 = vadd.f32 %v777, %v834
      %v851 = vadd.f32 %v778, %v835
      %v852 = vadd.f32 %v779, %v836
      %v853 = vadd.f32 %v780, %v837
      %v854 = vadd.f32 %v781, %v838
      %v855 = vadd.f32 %v782, %v839
      %s856 = scalar_lea.vmem [#allocation2], 64
      %v857 = vld [vmem:[%s856 + $0x7] sm:$0xff]
      %v858 = vld [vmem:[%s856 + $0xf] sm:$0xff]
      %v859 = vld [vmem:[%s856 + $0x17] sm:$0xff]
      %v860 = vld [vmem:[%s856 + $0x27] sm:$0xff]
      %v861 = vld [vmem:[%s856 + $0x2f] sm:$0xff]
      %v862 = vld [vmem:[%s856 + $0x37] sm:$0xff]
      %v863 = vld [vmem:[%s856 + $0x47] sm:$0xff]
      %v864 = vld [vmem:[%s856 + $0x4f] sm:$0xff]
      %v865 = vld [vmem:[%s856 + $0x57] sm:$0xff]
      %v866 = vld [vmem:[%s856 + $0x67] sm:$0xff]
      %v867 = vld [vmem:[%s856 + $0x6f] sm:$0xff]
      %v868 = vld [vmem:[%s856 + $0x77] sm:$0xff]
      %v869 = vld [vmem:[%s856 + $0x87] sm:$0xff]
      %v870 = vld [vmem:[%s856 + $0x8f] sm:$0xff]
      %v871 = vld [vmem:[%s856 + $0x97] sm:$0xff]
      %v872 = vld [vmem:[%s856 + $0xa7] sm:$0xff]
      %v873 = vld [vmem:[%s856 + $0xaf] sm:$0xff]
      %v874 = vld [vmem:[%s856 + $0xb7] sm:$0xff]
      %v875 = vld [vmem:[%s856 + $0xc7] sm:$0xff]
      %v876 = vld [vmem:[%s856 + $0xcf] sm:$0xff]
      %v877 = vld [vmem:[%s856 + $0xd7] sm:$0xff]
      %v878 = vld [vmem:[%s856 + $0xe7] sm:$0xff]
      %v879 = vld [vmem:[%s856 + $0xef] sm:$0xff]
      %v880 = vld [vmem:[%s856 + $0xf7] sm:$0xff]
      %v881 = vperm.slane %v458, 0
      %v882 = vmul.f32 %v857, %v881
      %v883 = vmul.f32 %v858, %v881
      %v884 = vmul.f32 %v860, %v881
      %v885 = vmul.f32 %v861, %v881
      %v886 = vmul.f32 %v863, %v881
      %v887 = vmul.f32 %v864, %v881
      %v888 = vmul.f32 %v866, %v881
      %v889 = vmul.f32 %v867, %v881
      %v890 = vmul.f32 %v869, %v881
      %v891 = vmul.f32 %v870, %v881
      %v892 = vmul.f32 %v872, %v881
      %v893 = vmul.f32 %v873, %v881
      %v894 = vmul.f32 %v875, %v881
      %v895 = vmul.f32 %v876, %v881
      %v896 = vmul.f32 %v878, %v881
      %v897 = vmul.f32 %v879, %v881
      %v898 = vadd.f32 %v840, %v882
      %v899 = vadd.f32 %v841, %v883
      %v900 = vadd.f32 %v842, %v884
      %v901 = vadd.f32 %v843, %v885
      %v902 = vadd.f32 %v844, %v886
      %v903 = vadd.f32 %v845, %v887
      %v904 = vadd.f32 %v846, %v888
      %v905 = vadd.f32 %v847, %v889
      %v906 = vadd.f32 %v848, %v890
      %v907 = vadd.f32 %v849, %v891
      %v908 = vadd.f32 %v850, %v892
      %v909 = vadd.f32 %v851, %v893
      %v910 = vadd.f32 %v852, %v894
      %v911 = vadd.f32 %v853, %v895
      %v912 = vadd.f32 %v854, %v896
      %v913 = vadd.f32 %v855, %v897
      %v914 = vrot.slane %v857, 1
      %v915 = vrot.slane %v860, 1
      %v916 = vrot.slane %v863, 1
      %v917 = vrot.slane %v866, 1
      %v918 = vrot.slane %v869, 1
      %v919 = vrot.slane %v872, 1
      %v920 = vrot.slane %v875, 1
      %v921 = vrot.slane %v878, 1
      %v922 = vrot.slane %v858, 1
      %v923 = vrot.slane %v861, 1
      %v924 = vrot.slane %v864, 1
      %v925 = vrot.slane %v867, 1
      %v926 = vrot.slane %v870, 1
      %v927 = vrot.slane %v873, 1
      %v928 = vrot.slane %v876, 1
      %v929 = vrot.slane %v879, 1
      %v930 = vrot.slane %v859, 1
      %v931 = vrot.slane %v862, 1
      %v932 = vrot.slane %v865, 1
      %v933 = vrot.slane %v868, 1
      %v934 = vrot.slane %v871, 1
      %v935 = vrot.slane %v874, 1
      %v936 = vrot.slane %v877, 1
      %v937 = vrot.slane %v880, 1
      %v938 = vsel %vm529, %v922, %v930
      %v939 = vsel %vm529, %v923, %v931
      %v940 = vsel %vm529, %v924, %v932
      %v941 = vsel %vm529, %v925, %v933
      %v942 = vsel %vm529, %v926, %v934
      %v943 = vsel %vm529, %v927, %v935
      %v944 = vsel %vm529, %v928, %v936
      %v945 = vsel %vm529, %v929, %v937
      %v946 = vsel %vm529, %v914, %v922
      %v947 = vsel %vm529, %v915, %v923
      %v948 = vsel %vm529, %v916, %v924
      %v949 = vsel %vm529, %v917, %v925
      %v950 = vsel %vm529, %v918, %v926
      %v951 = vsel %vm529, %v919, %v927
      %v952 = vsel %vm529, %v920, %v928
      %v953 = vsel %vm529, %v921, %v929
      %v954 = vperm.slane %v458, 1
      %v955 = vmul.f32 %v946, %v954
      %v956 = vmul.f32 %v938, %v954
      %v957 = vmul.f32 %v947, %v954
      %v958 = vmul.f32 %v939, %v954
      %v959 = vmul.f32 %v948, %v954
      %v960 = vmul.f32 %v940, %v954
      %v961 = vmul.f32 %v949, %v954
      %v962 = vmul.f32 %v941, %v954
      %v963 = vmul.f32 %v950, %v954
      %v964 = vmul.f32 %v942, %v954
      %v965 = vmul.f32 %v951, %v954
      %v966 = vmul.f32 %v943, %v954
      %v967 = vmul.f32 %v952, %v954
      %v968 = vmul.f32 %v944, %v954
      %v969 = vmul.f32 %v953, %v954
      %v970 = vmul.f32 %v945, %v954
      %v971 = vadd.f32 %v898, %v955
      %v972 = vadd.f32 %v899, %v956
      %v973 = vadd.f32 %v900, %v957
      %v974 = vadd.f32 %v901, %v958
      %v975 = vadd.f32 %v902, %v959
      %v976 = vadd.f32 %v903, %v960
      %v977 = vadd.f32 %v904, %v961
      %v978 = vadd.f32 %v905, %v962
      %v979 = vadd.f32 %v906, %v963
      %v980 = vadd.f32 %v907, %v964
      %v981 = vadd.f32 %v908, %v965
      %v982 = vadd.f32 %v909, %v966
      %v983 = vadd.f32 %v910, %v967
      %v984 = vadd.f32 %v911, %v968
      %v985 = vadd.f32 %v912, %v969
      %v986 = vadd.f32 %v913, %v970
      %v987 = vrot.slane %v857, 2
      %v988 = vrot.slane %v860, 2
      %v989 = vrot.slane %v863, 2
      %v990 = vrot.slane %v866, 2
      %v991 = vrot.slane %v869, 2
      %v992 = vrot.slane %v872, 2
      %v993 = vrot.slane %v875, 2
      %v994 = vrot.slane %v878, 2
      %v995 = vrot.slane %v858, 2
      %v996 = vrot.slane %v861, 2
      %v997 = vrot.slane %v864, 2
      %v998 = vrot.slane %v867, 2
      %v999 = vrot.slane %v870, 2
      %v1000 = vrot.slane %v873, 2
      %v1001 = vrot.slane %v876, 2
      %v1002 = vrot.slane %v879, 2
      %v1003 = vrot.slane %v859, 2
      %v1004 = vrot.slane %v862, 2
      %v1005 = vrot.slane %v865, 2
      %v1006 = vrot.slane %v868, 2
      %v1007 = vrot.slane %v871, 2
      %v1008 = vrot.slane %v874, 2
      %v1009 = vrot.slane %v877, 2
      %v1010 = vrot.slane %v880, 2
      %v1011 = vsel %vm603, %v995, %v1003
      %v1012 = vsel %vm603, %v996, %v1004
      %v1013 = vsel %vm603, %v997, %v1005
      %v1014 = vsel %vm603, %v998, %v1006
      %v1015 = vsel %vm603, %v999, %v1007
      %v1016 = vsel %vm603, %v1000, %v1008
      %v1017 = vsel %vm603, %v1001, %v1009
      %v1018 = vsel %vm603, %v1002, %v1010
      %v1019 = vsel %vm603, %v987, %v995
      %v1020 = vsel %vm603, %v988, %v996
      %v1021 = vsel %vm603, %v989, %v997
      %v1022 = vsel %vm603, %v990, %v998
      %v1023 = vsel %vm603, %v991, %v999
      %v1024 = vsel %vm603, %v992, %v1000
      %v1025 = vsel %vm603, %v993, %v1001
      %v1026 = vsel %vm603, %v994, %v1002
      %v1027 = vperm.slane %v458, 2
      %v1028 = vmul.f32 %v1019, %v1027
      %v1029 = vmul.f32 %v1011, %v1027
      %v1030 = vmul.f32 %v1020, %v1027
      %v1031 = vmul.f32 %v1012, %v1027
      %v1032 = vmul.f32 %v1021, %v1027
      %v1033 = vmul.f32 %v1013, %v1027
      %v1034 = vmul.f32 %v1022, %v1027
      %v1035 = vmul.f32 %v1014, %v1027
      %v1036 = vmul.f32 %v1023, %v1027
      %v1037 = vmul.f32 %v1015, %v1027
      %v1038 = vmul.f32 %v1024, %v1027
      %v1039 = vmul.f32 %v1016, %v1027
      %v1040 = vmul.f32 %v1025, %v1027
      %v1041 = vmul.f32 %v1017, %v1027
      %v1042 = vmul.f32 %v1026, %v1027
      %v1043 = vmul.f32 %v1018, %v1027
      %v1044 = vadd.f32 %v971, %v1028
      %v1045 = vadd.f32 %v972, %v1029
      %v1046 = vadd.f32 %v973, %v1030
      %v1047 = vadd.f32 %v974, %v1031
      %v1048 = vadd.f32 %v975, %v1032
      %v1049 = vadd.f32 %v976, %v1033
      %v1050 = vadd.f32 %v977, %v1034
      %v1051 = vadd.f32 %v978, %v1035
      %v1052 = vadd.f32 %v979, %v1036
      %v1053 = vadd.f32 %v980, %v1037
      %v1054 = vadd.f32 %v981, %v1038
      %v1055 = vadd.f32 %v982, %v1039
      %v1056 = vadd.f32 %v983, %v1040
      %v1057 = vadd.f32 %v984, %v1041
      %v1058 = vadd.f32 %v985, %v1042
      %v1059 = vadd.f32 %v986, %v1043
      %v1061 = vperm.slane %v459, 0
      %v1063 = vadd.f32 %v1044, %v1061
      %v1064 = vadd.f32 %v1045, %v1061
      %v1065 = vadd.f32 %v1046, %v1061
      %v1066 = vadd.f32 %v1047, %v1061
      %v1067 = vadd.f32 %v1048, %v1061
      %v1068 = vadd.f32 %v1049, %v1061
      %v1069 = vadd.f32 %v1050, %v1061
      %v1070 = vadd.f32 %v1051, %v1061
      %v1071 = vadd.f32 %v1052, %v1061
      %v1072 = vadd.f32 %v1053, %v1061
      %v1073 = vadd.f32 %v1054, %v1061
      %v1074 = vadd.f32 %v1055, %v1061
      %v1075 = vadd.f32 %v1056, %v1061
      %v1076 = vadd.f32 %v1057, %v1061
      %v1077 = vadd.f32 %v1058, %v1061
      %v1078 = vadd.f32 %v1059, %v1061
      %v1079 = vmax.f32 %v1063, 0.0
      %v1080 = vmax.f32 %v1064, 0.0
      %v1081 = vmax.f32 %v1065, 0.0
      %v1082 = vmax.f32 %v1066, 0.0
      %v1083 = vmax.f32 %v1067, 0.0
      %v1084 = vmax.f32 %v1068, 0.0
      %v1085 = vmax.f32 %v1069, 0.0
      %v1086 = vmax.f32 %v1070, 0.0
      %v1087 = vmax.f32 %v1071, 0.0
      %v1088 = vmax.f32 %v1072, 0.0
      %v1089 = vmax.f32 %v1073, 0.0
      %v1090 = vmax.f32 %v1074, 0.0
      %v1091 = vmax.f32 %v1075, 0.0
      %v1092 = vmax.f32 %v1076, 0.0
      %v1093 = vmax.f32 %v1077, 0.0
      %v1094 = vmax.f32 %v1078, 0.0
      %v1096 = vsel %vm415, %v1079, 0
      %v1099 = vsel %vm415, %v1080, 0
      %v1102 = vsel %vm415, %v1081, 0
      %v1105 = vsel %vm415, %v1082, 0
      %v1108 = vsel %vm415, %v1083, 0
      %v1111 = vsel %vm415, %v1084, 0
      %v1114 = vsel %vm415, %v1085, 0
      %v1117 = vsel %vm415, %v1086, 0
      %v1120 = vsel %vm415, %v1087, 0
      %v1123 = vsel %vm415, %v1088, 0
      %v1126 = vsel %vm415, %v1089, 0
      %v1129 = vsel %vm415, %v1090, 0
      %v1132 = vsel %vm415, %v1091, 0
      %v1135 = vsel %vm415, %v1092, 0
      %v1138 = vsel %vm415, %v1093, 0
      %v1141 = vsel %vm415, %v1094, 0
      %vm1143 = vcmask 1043456
      %v1145 = vsel %vm1143, %v460, 0
      %1147 = vmatpush.msra.mxu0 0.0
      %1148 = vmatpush.msra.mxu0 0.0
      %1149 = vmatpush.msra.mxu0 0.0
      %1150 = vmatpush.msra.mxu0 0.0
      %1151 = vmatpush.msra.mxu0 0.0
      %1152 = vmatpush.msra.mxu0 0.0
      %1153 = vmatpush.msra.mxu0 0.0
      %1154 = vmatpush.msra.mxu0 0.0
      %1155 = vmatpush.msra.mxu0 0.0
      %1156 = vmatpush.msra.mxu0 0.0
      %1157 = vmatpush.msra.mxu0 0.0
      %1158 = vmatpush.msra.mxu0 0.0
      %1159 = vmatpush.msra.mxu0 0.0
      %1160 = vmatpush.msra.mxu0 0.0
      %1161 = vmatpush.msra.mxu0 0.0
      %1162 = vmatpush.msra.mxu0 %v1145
      %1163 = vmatmul.f32.gmra.mxu0 %v1096
      %v1164 = vpop.f32.mrf.mxu0
      %v1165 = vadd.f32 0.0, %v1164
      %1166 = vmatmul.f32.gmra.mxu0 %v1099
      %v1167 = vpop.f32.mrf.mxu0
      %v1168 = vadd.f32 0.0, %v1167
      %1169 = vmatmul.f32.gmra.mxu0 %v1102
      %v1170 = vpop.f32.mrf.mxu0
      %v1171 = vadd.f32 0.0, %v1170
      %1172 = vmatmul.f32.gmra.mxu0 %v1105
      %v1173 = vpop.f32.mrf.mxu0
      %v1174 = vadd.f32 0.0, %v1173
      %1175 = vmatmul.f32.gmra.mxu0 %v1108
      %v1176 = vpop.f32.mrf.mxu0
      %v1177 = vadd.f32 0.0, %v1176
      %1178 = vmatmul.f32.gmra.mxu0 %v1111
      %v1179 = vpop.f32.mrf.mxu0
      %v1180 = vadd.f32 0.0, %v1179
      %1181 = vmatmul.f32.gmra.mxu0 %v1114
      %v1182 = vpop.f32.mrf.mxu0
      %v1183 = vadd.f32 0.0, %v1182
      %1184 = vmatmul.f32.gmra.mxu0 %v1117
      %v1185 = vpop.f32.mrf.mxu0
      %v1186 = vadd.f32 0.0, %v1185
      %1187 = vmatmul.f32.gmra.mxu0 %v1120
      %v1188 = vpop.f32.mrf.mxu0
      %v1189 = vadd.f32 0.0, %v1188
      %1190 = vmatmul.f32.gmra.mxu0 %v1123
      %v1191 = vpop.f32.mrf.mxu0
      %v1192 = vadd.f32 0.0, %v1191
      %1193 = vmatmul.f32.gmra.mxu0 %v1126
      %v1194 = vpop.f32.mrf.mxu0
      %v1195 = vadd.f32 0.0, %v1194
      %1196 = vmatmul.f32.gmra.mxu0 %v1129
      %v1197 = vpop.f32.mrf.mxu0
      %v1198 = vadd.f32 0.0, %v1197
      %1199 = vmatmul.f32.gmra.mxu0 %v1132
      %v1200 = vpop.f32.mrf.mxu0
      %v1201 = vadd.f32 0.0, %v1200
      %1202 = vmatmul.f32.gmra.mxu0 %v1135
      %v1203 = vpop.f32.mrf.mxu0
      %v1204 = vadd.f32 0.0, %v1203
      %1205 = vmatmul.f32.gmra.mxu0 %v1138
      %v1206 = vpop.f32.mrf.mxu0
      %v1207 = vadd.f32 0.0, %v1206
      %1208 = vmatmul.f32.gmra.mxu0 %v1141
      %v1209 = vpop.f32.mrf.mxu0
      %v1210 = vadd.f32 0.0, %v1209
      %1211 = vdwg.mxu0
      %v1213 = vperm.slane %v461, 0
      %v1215 = vadd.f32 %v1165, %v1213
      %v1216 = vadd.f32 %v1168, %v1213
      %v1217 = vadd.f32 %v1171, %v1213
      %v1218 = vadd.f32 %v1174, %v1213
      %v1219 = vadd.f32 %v1177, %v1213
      %v1220 = vadd.f32 %v1180, %v1213
      %v1221 = vadd.f32 %v1183, %v1213
      %v1222 = vadd.f32 %v1186, %v1213
      %v1223 = vadd.f32 %v1189, %v1213
      %v1224 = vadd.f32 %v1192, %v1213
      %v1225 = vadd.f32 %v1195, %v1213
      %v1226 = vadd.f32 %v1198, %v1213
      %v1227 = vadd.f32 %v1201, %v1213
      %v1228 = vadd.f32 %v1204, %v1213
      %v1229 = vadd.f32 %v1207, %v1213
      %v1230 = vadd.f32 %v1210, %v1213
      %v1231 = vmax.f32 %v1215, 0.0
      %v1232 = vmax.f32 %v1216, 0.0
      %v1233 = vmax.f32 %v1217, 0.0
      %v1234 = vmax.f32 %v1218, 0.0
      %v1235 = vmax.f32 %v1219, 0.0
      %v1236 = vmax.f32 %v1220, 0.0
      %v1237 = vmax.f32 %v1221, 0.0
      %v1238 = vmax.f32 %v1222, 0.0
      %v1239 = vmax.f32 %v1223, 0.0
      %v1240 = vmax.f32 %v1224, 0.0
      %v1241 = vmax.f32 %v1225, 0.0
      %v1242 = vmax.f32 %v1226, 0.0
      %v1243 = vmax.f32 %v1227, 0.0
      %v1244 = vmax.f32 %v1228, 0.0
      %v1245 = vmax.f32 %v1229, 0.0
      %v1246 = vmax.f32 %v1230, 0.0
      %vm1247 = vcmask 64512
      %1248 = vst.msk [vmem:[%s389] sm:$0xff] %vm1247, %v1231
      %1249 = vst.msk [vmem:[%s389 + $0x8] sm:$0xff] %vm1247, %v1232
      %1250 = vst.msk [vmem:[%s389 + $0x10] sm:$0xff] %vm1247, %v1233
      %1251 = vst.msk [vmem:[%s389 + $0x18] sm:$0xff] %vm1247, %v1234
      %1252 = vst.msk [vmem:[%s389 + $0x20] sm:$0xff] %vm1247, %v1235
      %1253 = vst.msk [vmem:[%s389 + $0x28] sm:$0xff] %vm1247, %v1236
      %1254 = vst.msk [vmem:[%s389 + $0x30] sm:$0xff] %vm1247, %v1237
      %1255 = vst.msk [vmem:[%s389 + $0x38] sm:$0xff] %vm1247, %v1238
      %1256 = vst.msk [vmem:[%s389 + $0x40] sm:$0xff] %vm1247, %v1239
      %1257 = vst.msk [vmem:[%s389 + $0x48] sm:$0xff] %vm1247, %v1240
      %1258 = vst.msk [vmem:[%s389 + $0x50] sm:$0xff] %vm1247, %v1241
      %1259 = vst.msk [vmem:[%s389 + $0x58] sm:$0xff] %vm1247, %v1242
      %1260 = vst.msk [vmem:[%s389 + $0x60] sm:$0xff] %vm1247, %v1243
      %1261 = vst.msk [vmem:[%s389 + $0x68] sm:$0xff] %vm1247, %v1244
      %1262 = vst.msk [vmem:[%s389 + $0x70] sm:$0xff] %vm1247, %v1245
      %1263 = vst.msk [vmem:[%s389 + $0x78] sm:$0xff] %vm1247, %v1246
      %s1264 = smul.u32 8, %s23
      %p1265 = scmp.lt.s32.totalorder %s22, 1
      %s1266 = scalar_select %p1265, %s22, 1
      %p1267 = scmp.lt.s32.totalorder %s1264, 15
      %s1268 = scalar_select %p1267, %s1264, 15
      %s1269 = smul.addr %s1268, 2
      %s1270 = smul.addr %s1266, 32
      %s1271 = sadd.s32 %s1269, %s1270
      %s1272 = smul.addr %s1271, 8
      %s1273 = scalar_lea.vmem %s7, %s1272
      // Predicated region
      $region49: #{depthwise_block.1} parent=47 // pred_check
        %p1274 = pneg %p218
      $region50: #{depthwise_block.1} parent=47 // pred_check_branch
        %1276 = sbr.rel (%p1274) target = $region52
      $region51: #{depthwise_block.1} parent=47 // pred_region
        %s1277 = smul.u32 8, %s23
      $region52: #{depthwise_block.1} parent=47 // pred_fallthru
        _
    $region48: #{depthwise_block.1} parent=5 // pred_fallthru
      _
    %p1278 = scmp.le.s32.totalorder 2, %s13
    // Predicated region
    $region53: #{depthwise_block.1} parent=5 // pred_check
      %p1279 = pneg %p1278
    $region54: #{depthwise_block.1} parent=5 // pred_check_branch
      %1281 = sbr.rel (%p1279) target = $region56
    $region55: #{depthwise_block.1} parent=5 // pred_region
      %s1282 = ssub.s32 %s13, 2
      // Predicated region
      $region57: #{depthwise_block.1} parent=55 // pred_check
        %p1283 = pneg %p224
      $region58: #{depthwise_block.1} parent=55 // pred_check_branch
        %1285 = sbr.rel (%p1283) target = $region60
      $region59: #{depthwise_block.1} parent=55 // pred_region
        %s1286 = smul.u32 8, %s25
        %p1287 = scmp.lt.s32.totalorder %s24, 1
        %s1288 = scalar_select %p1287, %s24, 1
        %p1289 = scmp.lt.s32.totalorder %s1286, 15
        %s1290 = scalar_select %p1289, %s1286, 15
        %s1291 = smul.addr %s1290, 2
        %s1292 = smul.addr %s1288, 32
        %s1293 = sadd.s32 %s1291, %s1292
        %s1294 = smul.addr %s1293, 8
        %s1295 = scalar_lea.vmem %s7, %s1294
      $region60: #{depthwise_block.1} parent=55 // pred_fallthru
        _
    $region56: #{depthwise_block.1} parent=5 // pred_fallthru
      _
  $region6: #{depthwise_block.1} parent=0 // loop_footer
    %s17 = sadd.s32 1, %s13
  $region7: #{depthwise_block.1} parent=0 // loop_footer_branch
    %12 = sbr.rel target = $region3
  $region8: #{depthwise_block.1} parent=0 // loop_exit
    _

</llo_original>
